<compile_context>
chip_gen: v6e
topology: v6e:2x2x1
jax: 0.10.0
libtpu: 0.0.40
codegen_flags: <defaults>
</compile_context>

<pallas_src>
import jax
import jax.numpy as jnp
from jax.experimental import pallas as pl
from jax.experimental.pallas import tpu as pltpu

# --- model constants (from the PyTorch module) ---
d_model = 512
d_ff = 2048
_LN_EPS = 1e-5

_TK_FF = 512          # d_ff chunk streamed per grid step
_TM_MAX = 1024        # M-tile cap (fits all TPU generations with d_ff chunked)


def _round_up(x, m):
    return ((x + m - 1) // m) * m


def ffn_kernel(x_ref, w1_ref, w2_ref, out_ref, acc_ref):
    """One (M-tile, d_ff-chunk) step of FC1 -> ReLU -> FC2(+acc); on the last
    d_ff chunk: residual add + LayerNorm(no affine) and store.

    x_ref   : [tm, d_model]   float32 activations (resident across the k axis)
    w1_ref  : [d_model, tk]   bfloat16 chunk of W1 (pre-transposed, y = x @ W)
    w2_ref  : [tk, d_model]   bfloat16 chunk of W2
    out_ref : [tm, d_model]   float32
    acc_ref : [tm, d_model]   float32 FC2 accumulator (VMEM scratch)
    """
    k = pl.program_id(1)

    @pl.when(k == 0)
    def _():
        acc_ref[...] = jnp.zeros_like(acc_ref)

    x = x_ref[...]                                       # fp32 (residual)

    # FC1 chunk -> ReLU (bf16 inputs, fp32 accumulation on the MXU).
    h = jnp.dot(x.astype(jnp.bfloat16), w1_ref[...],
                preferred_element_type=jnp.float32)      # [tm, tk]
    h = jnp.maximum(h, 0.0)

    # FC2 partial product, accumulated over d_ff chunks in fp32.
    acc_ref[...] += jnp.dot(h.astype(jnp.bfloat16), w2_ref[...],
                            preferred_element_type=jnp.float32)

    @pl.when(k == pl.num_programs(1) - 1)
    def _():
        # residual add + LayerNorm(d_model) with gamma=1, beta=0.
        y = acc_ref[...] + x
        mu = jnp.mean(y, axis=-1, keepdims=True)
        var = jnp.mean((y - mu) ** 2, axis=-1, keepdims=True)
        out_ref[...] = (y - mu) * jax.lax.rsqrt(var + _LN_EPS)


def poswise_ffn(x, w1_t_bf16, w2_t_bf16):
    """x: [B, L, d_model] float32.  Weights pre-transposed [in, out], bfloat16."""
    B, L, D = x.shape
    assert D == d_model

    # Fold batch + seq into the matmul M dimension.
    M = B * L
    xf = x.reshape(M, D)

    # M tile: whole problem if small (multiple of 16 for clean bf16 packing),
    # else 1024 rows (fits every generation's VMEM with d_ff chunked).
    tm = min(_TM_MAX, _round_up(M, 16))
    Mp = _round_up(M, tm)
    if Mp != M:
        xf = jnp.pad(xf, ((0, Mp - M), (0, 0)))          # zero rows stay 0

    m_tiles = Mp // tm
    k_tiles = d_ff // _TK_FF

    cost = pl.CostEstimate(
        flops=4 * Mp * d_model * d_ff,                   # FC1 + FC2
        transcendentals=Mp,                              # one rsqrt per row
        bytes_accessed=(Mp * D * 4) * 2                  # x in + out
        + 2 * d_model * d_ff * 2,                        # bf16 W1 + W2
    )

    out = pl.pallas_call(
        ffn_kernel,
        out_shape=jax.ShapeDtypeStruct((Mp, D), jnp.float32),
        grid=(m_tiles, k_tiles),
        in_specs=[
            pl.BlockSpec((tm, D), lambda i, k: (i, 0)),        # activations
            pl.BlockSpec((D, _TK_FF), lambda i, k: (0, k)),    # W1 chunk
            pl.BlockSpec((_TK_FF, D), lambda i, k: (k, 0)),    # W2 chunk
        ],
        out_specs=pl.BlockSpec((tm, D), lambda i, k: (i, 0)),
        scratch_shapes=[pltpu.VMEM((tm, D), jnp.float32)],     # FC2 accumulator
        compiler_params=pltpu.CompilerParams(
            # M tiles are independent -> "parallel" (uses both v7x cores);
            # the d_ff axis carries the accumulator -> "arbitrary", last.
            dimension_semantics=("parallel", "arbitrary"),
            vmem_limit_bytes=48 << 20,
        ),
        cost_estimate=cost,
    )(xf, w1_t_bf16, w2_t_bf16)

    return out[:M].reshape(B, L, D)


def _reference(x, w1_t_bf16, w2_t_bf16):
    """Pure-JAX reference with the same bf16-weight / fp32-accum numerics."""
    xb = x.astype(jnp.bfloat16)
    h = jnp.maximum(
        jnp.dot(xb, w1_t_bf16, preferred_element_type=jnp.float32), 0.0)
    y = jnp.dot(h.astype(jnp.bfloat16), w2_t_bf16,
                preferred_element_type=jnp.float32) + x
    mu = jnp.mean(y, axis=-1, keepdims=True)
    var = jnp.mean((y - mu) ** 2, axis=-1, keepdims=True)
    return (y - mu) * jax.lax.rsqrt(var + _LN_EPS)


if __name__ == "__main__":
    # TODO(synk): the module builds a fresh nn.LayerNorm in forward(), so there
    # are no learned gamma/beta; we implement that exact (affine-free) behavior.
    # Note: activations are cast to bf16 before both matmuls (deliberate
    # deviation from the fp32 PyTorch numerics; the reference matches it).
    B, L = 2, 8
    key = jax.random.PRNGKey(0)
    k_x, k_w1, k_w2 = jax.random.split(key, 3)

    x = jax.random.normal(k_x, (B, L, d_model), jnp.float32)
    # weights stored pre-transposed [in_features, out_features], bf16
    w1_t = (jax.random.normal(k_w1, (d_model, d_ff), jnp.float32) * 0.02
            ).astype(jnp.bfloat16)
    w2_t = (jax.random.normal(k_w2, (d_ff, d_model), jnp.float32) * 0.02
            ).astype(jnp.bfloat16)

    out = poswise_ffn(x, w1_t, w2_t)
    out = jax.block_until_ready(out)

    assert out.shape == (B, L, d_model)
    assert bool(jnp.all(jnp.isfinite(out)))
    # LayerNorm(no affine): every row has ~zero mean and ~unit variance.
    assert bool(jnp.allclose(jnp.mean(out, axis=-1), 0.0, atol=1e-3))
    assert bool(jnp.allclose(jnp.var(out, axis=-1), 1.0, atol=1e-2))
    # match the pure-JAX reference with identical bf16/fp32 numerics
    ref = _reference(x, w1_t, w2_t)
    assert bool(jnp.allclose(out, ref, atol=2e-2, rtol=2e-2))

    print("KERNEL_OK")
</pallas_src>

<mosaic_0001>
module attributes {stable_mosaic.version = 11 : i64} {
  func.func @ffn_kernel(%arg0: i32, %arg1: i32, %arg2: memref<16x512xf32, #tpu.memory_space<vmem>>, %arg3: memref<512x512xbf16, #tpu.memory_space<vmem>>, %arg4: memref<512x512xbf16, #tpu.memory_space<vmem>>, %arg5: memref<16x512xf32, #tpu.memory_space<vmem>>, %arg6: memref<16x512xf32, #tpu.memory_space<vmem>>) attributes {dimension_semantics = [#tpu.dimension_semantics<parallel>, #tpu.dimension_semantics<arbitrary>], iteration_bounds = array<i64: 1, 4>, scalar_prefetch = 0 : i64, scratch_operands = 1 : i64, tpu.core_type = #tpu.core_type<tc>, window_params = [{transform_indices = @transform_0, window_bounds = array<i64: 16, 512>}, {transform_indices = @transform_1, window_bounds = array<i64: 512, 512>}, {transform_indices = @transform_2, window_bounds = array<i64: 512, 512>}, {transform_indices = @transform_3, window_bounds = array<i64: 16, 512>}]} {
    %c0_i32 = arith.constant 0 : i32
    %0 = arith.cmpi eq, %arg1, %c0_i32 : i32
    %1 = arith.extui %0 : i1 to i32
    %c0_i32_0 = arith.constant 0 : i32
    %2 = arith.cmpi ne, %1, %c0_i32_0 : i32
    scf.if %2 {
      %cst_13 = arith.constant 0.000000e+00 : f32
      %18 = vector.broadcast %cst_13 : f32 to vector<16x512xf32>
      %c0_14 = arith.constant 0 : index
      %c0_15 = arith.constant 0 : index
      %19 = vector.load %arg6[%c0_14, %c0_15] : memref<16x512xf32, #tpu.memory_space<vmem>>, vector<16x512xf32>
      tpu.vector_store %arg6[%c0_14, %c0_15], %18 {strides = array<i32>} : memref<16x512xf32, #tpu.memory_space<vmem>>, vector<16x512xf32>,
    } else {
    }
    %c0 = arith.constant 0 : index
    %c0_1 = arith.constant 0 : index
    %3 = vector.load %arg2[%c0, %c0_1] : memref<16x512xf32, #tpu.memory_space<vmem>>, vector<16x512xf32>
    %4 = arith.truncf %3 : vector<16x512xf32> to vector<16x512xbf16>
    %c0_2 = arith.constant 0 : index
    %c0_3 = arith.constant 0 : index
    %5 = vector.load %arg3[%c0_2, %c0_3] : memref<512x512xbf16, #tpu.memory_space<vmem>>, vector<512x512xbf16>
    %cst = arith.constant dense<0.000000e+00> : vector<16x512xf32>
    %6 = tpu.matmul %4, %5, %cst {dimension_numbers = #tpu.dot_dimension_numbers<[1], [0], [0], [1], [0, 0, 1, 1], [], []>} : vector<16x512xbf16>, vector<512x512xbf16>, vector<16x512xf32> -> vector<16x512xf32>
    %cst_4 = arith.constant 0.000000e+00 : f32
    %7 = vector.broadcast %cst_4 : f32 to vector<16x512xf32>
    %8 = arith.maximumf %6, %7 : vector<16x512xf32>
    %c0_5 = arith.constant 0 : index
    %c0_6 = arith.constant 0 : index
    %9 = vector.load %arg6[%c0_5, %c0_6] : memref<16x512xf32, #tpu.memory_space<vmem>>, vector<16x512xf32>
    %10 = arith.truncf %8 : vector<16x512xf32> to vector<16x512xbf16>
    %c0_7 = arith.constant 0 : index
    %c0_8 = arith.constant 0 : index
    %11 = vector.load %arg4[%c0_7, %c0_8] : memref<512x512xbf16, #tpu.memory_space<vmem>>, vector<512x512xbf16>
    %cst_9 = arith.constant dense<0.000000e+00> : vector<16x512xf32>
    %12 = tpu.matmul %10, %11, %cst_9 {dimension_numbers = #tpu.dot_dimension_numbers<[1], [0], [0], [1], [0, 0, 1, 1], [], []>} : vector<16x512xbf16>, vector<512x512xbf16>, vector<16x512xf32> -> vector<16x512xf32>
    %13 = arith.addf %9, %12 : vector<16x512xf32>
    %c0_10 = arith.constant 0 : index
    %c0_11 = arith.constant 0 : index
    %14 = vector.load %arg6[%c0_10, %c0_11] : memref<16x512xf32, #tpu.memory_space<vmem>>, vector<16x512xf32>
    tpu.vector_store %arg6[%c0_10, %c0_11], %13 {strides = array<i32>} : memref<16x512xf32, #tpu.memory_space<vmem>>, vector<16x512xf32>,
    %c3_i32 = arith.constant 3 : i32
    %15 = arith.cmpi eq, %arg1, %c3_i32 : i32
    %16 = arith.extui %15 : i1 to i32
    %c0_i32_12 = arith.constant 0 : i32
    %17 = arith.cmpi ne, %16, %c0_i32_12 : i32
    scf.if %17 {
      %c0_13 = arith.constant 0 : index
      %c0_14 = arith.constant 0 : index
      %18 = vector.load %arg6[%c0_13, %c0_14] : memref<16x512xf32, #tpu.memory_space<vmem>>, vector<16x512xf32>
      %19 = arith.addf %18, %3 : vector<16x512xf32>
      %cst_15 = arith.constant dense<0.000000e+00> : vector<16xf32>
      %20 = vector.multi_reduction <add>, %19, %cst_15 [1] : vector<16x512xf32> to vector<16xf32>
      %21 = vector.shape_cast %20 : vector<16xf32> to vector<16x1xf32>
      %cst_16 = arith.constant 5.120000e+02 : f32
      %22 = vector.broadcast %cst_16 : f32 to vector<16x1xf32>
      %23 = arith.divf %21, %22 : vector<16x1xf32>
      %24 = vector.broadcast %23 : vector<16x1xf32> to vector<16x512xf32>
      %25 = arith.subf %19, %24 : vector<16x512xf32>
      %26 = arith.mulf %25, %25 : vector<16x512xf32>
      %cst_17 = arith.constant dense<0.000000e+00> : vector<16xf32>
      %27 = vector.multi_reduction <add>, %26, %cst_17 [1] : vector<16x512xf32> to vector<16xf32>
      %28 = vector.shape_cast %27 : vector<16xf32> to vector<16x1xf32>
      %cst_18 = arith.constant 5.120000e+02 : f32
      %29 = vector.broadcast %cst_18 : f32 to vector<16x1xf32>
      %30 = arith.divf %28, %29 : vector<16x1xf32>
      %31 = vector.broadcast %23 : vector<16x1xf32> to vector<16x512xf32>
      %32 = arith.subf %19, %31 : vector<16x512xf32>
      %cst_19 = arith.constant 9.99999974E-6 : f32
      %33 = vector.broadcast %cst_19 : f32 to vector<16x1xf32>
      %34 = arith.addf %30, %33 : vector<16x1xf32>
      %35 = math.rsqrt %34 : vector<16x1xf32>
      %36 = vector.broadcast %35 : vector<16x1xf32> to vector<16x512xf32>
      %37 = arith.mulf %32, %36 : vector<16x512xf32>
      %c0_20 = arith.constant 0 : index
      %c0_21 = arith.constant 0 : index
      %38 = vector.load %arg5[%c0_20, %c0_21] : memref<16x512xf32, #tpu.memory_space<vmem>>, vector<16x512xf32>
      tpu.vector_store %arg5[%c0_20, %c0_21], %37 {strides = array<i32>} : memref<16x512xf32, #tpu.memory_space<vmem>>, vector<16x512xf32>,
    } else {
    }
    return
  }
  func.func @transform_0(%arg0: i32, %arg1: i32) -> (i32, i32) {
    %c0_i32 = arith.constant 0 : i32
    %c0_i32_0 = arith.constant 0 : i32
    return %arg0, %c0_i32 : i32, i32
  }
  func.func @transform_1(%arg0: i32, %arg1: i32) -> (i32, i32) {
    %c0_i32 = arith.constant 0 : i32
    %c0_i32_0 = arith.constant 0 : i32
    return %c0_i32, %arg1 : i32, i32
  }
  func.func @transform_2(%arg0: i32, %arg1: i32) -> (i32, i32) {
    %c0_i32 = arith.constant 0 : i32
    %c0_i32_0 = arith.constant 0 : i32
    return %arg1, %c0_i32 : i32, i32
  }
  func.func @transform_3(%arg0: i32, %arg1: i32) -> (i32, i32) {
    %c0_i32 = arith.constant 0 : i32
    %c0_i32_0 = arith.constant 0 : i32
    return %arg0, %c0_i32 : i32, i32
  }
}

</mosaic_0001>

<llo_original>
// kernel: tpu_custom_call.1
$region0: #{tpu_custom_call.1}
  #allocation0 [shape = 'u32[]', space=smem, size = 0x4, offset = 0x4, fixed_abs, tag = 'smem constant byte address 0x4 - core index']
  #allocation1 [shape = 'u32[144,128]{1,0:T(1,128)}', space=vmem, size = 0x12000, scoped, tag = 'internal scratch']
  #allocation2 [shape = 'f32[16,512]{1,0:T(8,128)}', space=vmem, size = 0x8000, scoped, tag = 'scratch operand']
  %s0 = inlined_call_operand.hbm [shape: f32[16,512], index: 0, kind: input, shape index: {}]
  %s1 = inlined_call_operand.hbm [shape: bf16[512,2048], index: 1, kind: input, shape index: {}]
  %s2 = inlined_call_operand.hbm [shape: bf16[2048,512], index: 2, kind: input, shape index: {}]
  %s3 = inlined_call_operand.hbm [shape: f32[16,512], index: 3, kind: output, shape index: {}]
  %s4 = sld [smem:[#allocation0]]
  $region65: #{tpu_custom_call.1} parent=0
    _
  %s6 = ssub.s32 1, %s4
  %s7 = scalar_select 0, %s6, %s4
  $region1: #{tpu_custom_call.1} parent=0
    #allocation3 [shape = 'u8[32768]{0}', space=vmem, size = 0x8000, scoped, tag = 'input window, operand 0, single buffered']
    #allocation4 [shape = 's32[2]{0}', space=sflag, size = 0x8, scoped, tag = 'scoped memory for tpu_custom_call.1']
    #allocation5 [shape = 's32[2]{0}', space=sflag, size = 0x8, scoped, tag = 'scoped memory for tpu_custom_call.1']
    #allocation6 [shape = 'u8[1048576]{0}', space=vmem, size = 0x100000, scoped, tag = 'input window, operand 1']
    #allocation7 [shape = 's32[2]{0}', space=sflag, size = 0x8, scoped, tag = 'scoped memory for tpu_custom_call.1']
    #allocation8 [shape = 'u8[1048576]{0}', space=vmem, size = 0x100000, scoped, tag = 'input window, operand 2']
    #allocation9 [shape = 'u8[32768]{0}', space=vmem, size = 0x8000, scoped, tag = 'output window, operand 0, single buffered']
    %8 = vsyncpa [#allocation4], 0
    %9 = vsyncpa [#allocation7], 0
    %s10 = scalar_lea.sflag [#allocation7], 1
    %11 = vsyncpa %s10, 0
    %12 = vsyncpa [#allocation5], 0
    loop: start=0, step=1, limit=6
    $region2: #{tpu_custom_call.1} parent=1 // loop_pre_header
      _
    $region3: #{tpu_custom_call.1} parent=1 // loop_header
      %s14 = sphi 0, %s18
      %p15 = scmp.ge.s32.totalorder %s14, 6
      %s21 = sphi 0, %s33
      %s22 = sphi 0, %s29
      %s23 = sphi 0, %s21
      %s24 = sphi 0, %s22
      %s25 = sphi 0, %s23
      %s26 = sphi 0, %s24
      %s36 = sphi 0, %s38
      %s39 = sphi 0, %s36
      %s40 = sphi 0, %s39
      %s56 = sphi 0, %s40
      %s62 = sphi 0, %s64
      %s65 = sphi 0, %s62
      %s66 = sphi 0, %s65
      %s82 = sphi 0, %s66
      %s88 = sphi 0, %s90
      %s91 = sphi 0, %s88
      %s92 = sphi 0, %s91
      %s108 = sphi 0, %s92
      %s114 = sphi 0, %s116
      %s117 = sphi 0, %s114
      %s118 = sphi 0, %s117
      %s134 = sphi 0, %s118
    $region4: #{tpu_custom_call.1} parent=1 // loop_header_branch
      %17 = sbr.rel (%p15) target = $region8
    $region5: #{tpu_custom_call.1} parent=1 // loop_body
      %s19 = ssub.s32 %s14, 1
      %s20 = ssub.s32 %s14, 2
      %s27 = sadd.s32 1, %s22
      %p28 = scmp.ge.s32.totalorder %s27, 4
      %s29 = scalar_select %p28, 0, %s27
      %s30 = sadd.s32 1, %s21
      %s31 = scalar_select %p28, %s30, %s21
      %p32 = scmp.ge.s32.totalorder %s31, 1
      %s33 = scalar_select %p32, 0, %s31
      %s34 = ssub.s32 %s21, %s33
      %p35 = scmp.eq.s32.totalorder %s34, 0
      %s37 = sadd.s32 %s36, 1
      %s38 = scalar_select %p35, %s36, %s37
      %p41 = pneg %p35
      %p42 = scmp.eq.s32.totalorder %s14, 3
      %p43 = por %p41, %p42
      %p44 = scmp.ne.s32.totalorder %s36, %s39
      %p45 = scmp.eq.s32.totalorder %s14, 0
      %p46 = por %p44, %p45
      %p47 = scmp.ne.s32.totalorder %s36, %s39
      %p48 = scmp.eq.s32.totalorder %s19, 3
      %p49 = por %p47, %p48
      %p50 = scmp.ne.s32.totalorder %s39, %s40
      %p51 = scmp.eq.s32.totalorder %s19, 0
      %p52 = por %p50, %p51
      %p53 = scmp.ne.s32.totalorder %s39, %s40
      %p54 = scmp.eq.s32.totalorder %s20, 3
      %p55 = por %p53, %p54
      %p57 = scmp.ne.s32.totalorder %s40, %s56
      %p58 = scmp.eq.s32.totalorder %s20, 0
      %p59 = por %p57, %p58
      %s60 = ssub.s32 %s22, %s29
      %p61 = scmp.eq.s32.totalorder %s60, 0
      %s63 = sadd.s32 %s62, 1
      %s64 = scalar_select %p61, %s62, %s63
      %p67 = pneg %p61
      %p68 = scmp.eq.s32.totalorder %s14, 3
      %p69 = por %p67, %p68
      %p70 = scmp.ne.s32.totalorder %s62, %s65
      %p71 = scmp.eq.s32.totalorder %s14, 0
      %p72 = por %p70, %p71
      %p73 = scmp.ne.s32.totalorder %s62, %s65
      %p74 = scmp.eq.s32.totalorder %s19, 3
      %p75 = por %p73, %p74
      %p76 = scmp.ne.s32.totalorder %s65, %s66
      %p77 = scmp.eq.s32.totalorder %s19, 0
      %p78 = por %p76, %p77
      %p79 = scmp.ne.s32.totalorder %s65, %s66
      %p80 = scmp.eq.s32.totalorder %s20, 3
      %p81 = por %p79, %p80
      %p83 = scmp.ne.s32.totalorder %s66, %s82
      %p84 = scmp.eq.s32.totalorder %s20, 0
      %p85 = por %p83, %p84
      %s86 = ssub.s32 %s22, %s29
      %p87 = scmp.eq.s32.totalorder %s86, 0
      %s89 = sadd.s32 %s88, 1
      %s90 = scalar_select %p87, %s88, %s89
      %p93 = pneg %p87
      %p94 = scmp.eq.s32.totalorder %s14, 3
      %p95 = por %p93, %p94
      %p96 = scmp.ne.s32.totalorder %s88, %s91
      %p97 = scmp.eq.s32.totalorder %s14, 0
      %p98 = por %p96, %p97
      %p99 = scmp.ne.s32.totalorder %s88, %s91
      %p100 = scmp.eq.s32.totalorder %s19, 3
      %p101 = por %p99, %p100
      %p102 = scmp.ne.s32.totalorder %s91, %s92
      %p103 = scmp.eq.s32.totalorder %s19, 0
      %p104 = por %p102, %p103
      %p105 = scmp.ne.s32.totalorder %s91, %s92
      %p106 = scmp.eq.s32.totalorder %s20, 3
      %p107 = por %p105, %p106
      %p109 = scmp.ne.s32.totalorder %s92, %s108
      %p110 = scmp.eq.s32.totalorder %s20, 0
      %p111 = por %p109, %p110
      %s112 = ssub.s32 %s21, %s33
      %p113 = scmp.eq.s32.totalorder %s112, 0
      %s115 = sadd.s32 %s114, 1
      %s116 = scalar_select %p113, %s114, %s115
      %p119 = pneg %p113
      %p120 = scmp.eq.s32.totalorder %s14, 3
      %p121 = por %p119, %p120
      %p122 = scmp.ne.s32.totalorder %s114, %s117
      %p123 = scmp.eq.s32.totalorder %s14, 0
      %p124 = por %p122, %p123
      %p125 = scmp.ne.s32.totalorder %s114, %s117
      %p126 = scmp.eq.s32.totalorder %s19, 3
      %p127 = por %p125, %p126
      %p128 = scmp.ne.s32.totalorder %s117, %s118
      %p129 = scmp.eq.s32.totalorder %s19, 0
      %p130 = por %p128, %p129
      %p131 = scmp.ne.s32.totalorder %s117, %s118
      %p132 = scmp.eq.s32.totalorder %s20, 3
      %p133 = por %p131, %p132
      %p135 = scmp.ne.s32.totalorder %s118, %s134
      %p136 = scmp.eq.s32.totalorder %s20, 0
      %p137 = por %p135, %p136
      %p138 = scmp.le.s32.totalorder 1, %s14
      %p139 = scmp.lt.s32.totalorder %s14, 5
      %p140 = pnand %p138, %p139
      %p141 = pneg %p140
      // Predicated region
      $region9: #{tpu_custom_call.1} parent=5 // pred_check
        _
      $region10: #{tpu_custom_call.1} parent=5 // pred_check_branch
        %143 = sbr.rel (%p140) target = $region12
      $region11: #{tpu_custom_call.1} parent=5 // pred_region
        %s144 = ssub.s32 %s14, 1
        // Predicated region
        $region13: #{tpu_custom_call.1} parent=11 // pred_check
          %p145 = pneg %p52
        $region14: #{tpu_custom_call.1} parent=11 // pred_check_branch
          %147 = sbr.rel (%p145) target = $region16
        $region15: #{tpu_custom_call.1} parent=11 // pred_region
          %s148 = smul.u32 2, %s23
          %s150 = ssub.s32 1024, 1024
          %151 = vsyncadd [#allocation4], %s150
          %s152 = smul.addr %s148, 4
          %s153 = smul.addr %s152, 128
          %s154 = scalar_lea.hbm %s0, %s153
          %s155 = sshll.u32 [#allocation3], 4
          %s156 = int_to_ptr.vmem [resolvable:$true] %s155
          %161 = dma.hbm_to_vmem [thread:$0]  %s154, 1024, %s156, [#allocation4], 512, 512, 32
        $region16: #{tpu_custom_call.1} parent=11 // pred_fallthru
          _
      $region12: #{tpu_custom_call.1} parent=5 // pred_fallthru
        _
      %p162 = scmp.lt.s32.totalorder %s14, 4
      // Predicated region
      $region17: #{tpu_custom_call.1} parent=5 // pred_check
        %p163 = pneg %p162
      $region18: #{tpu_custom_call.1} parent=5 // pred_check_branch
        %165 = sbr.rel (%p163) target = $region20
      $region19: #{tpu_custom_call.1} parent=5 // pred_region
        // Predicated region
        $region21: #{tpu_custom_call.1} parent=19 // pred_check
          %p166 = pneg %p72
        $region22: #{tpu_custom_call.1} parent=19 // pred_check_branch
          %168 = sbr.rel (%p166) target = $region24
        $region23: #{tpu_custom_call.1} parent=19 // pred_region
          %s169 = sand.u32 %s14, 1
          %s170 = scalar_lea.sflag [#allocation7], %s169
          %s171 = sand.u32 %s62, 1
          %s172 = smul.addr %s171, 1024
          %s173 = scalar_lea.vmem [#allocation6], %s172
          %s174 = smul.u32 4, %s22
          %s176 = ssub.s32 16384, 16384
          %177 = vsyncadd %s170, %s176
          %s178 = smul.addr %s174, 64
          %s179 = scalar_lea.hbm %s1, %s178
          %s180 = sshll.u32 %s173, 4
          %s181 = int_to_ptr.vmem [resolvable:$true] %s180
          %186 = dma.hbm_to_vmem [thread:$0]  %s179, 16384, %s181, %s170, 1024, 256, 16
        $region24: #{tpu_custom_call.1} parent=19 // pred_fallthru
          _
        // Predicated region
        $region25: #{tpu_custom_call.1} parent=19 // pred_check
          %p187 = pneg %p98
        $region26: #{tpu_custom_call.1} parent=19 // pred_check_branch
          %189 = sbr.rel (%p187) target = $region28
        $region27: #{tpu_custom_call.1} parent=19 // pred_region
          %s190 = sand.u32 %s14, 1
          %s191 = scalar_lea.sflag [#allocation7], %s190
          %s192 = sand.u32 %s88, 1
          %s193 = smul.addr %s192, 1024
          %s194 = scalar_lea.vmem [#allocation8], %s193
          %s195 = smul.u32 64, %s22
          %s197 = ssub.s32 16384, 16384
          %198 = vsyncadd %s191, %s197
          %s199 = smul.addr %s195, 4
          %s200 = smul.addr %s199, 64
          %s201 = scalar_lea.hbm %s2, %s200
          %s202 = sshll.u32 %s194, 4
          %s203 = int_to_ptr.vmem [resolvable:$true] %s202
          %208 = dma.hbm_to_vmem [thread:$0]  %s201, 16384, %s203, %s191, 256, 256, 16
        $region28: #{tpu_custom_call.1} parent=19 // pred_fallthru
          _
      $region20: #{tpu_custom_call.1} parent=5 // pred_fallthru
        _
      %p209 = scmp.le.s32.totalorder 1, %s14
      %p210 = scmp.lt.s32.totalorder %s14, 5
      %p211 = pnand %p209, %p210
      %p212 = pneg %p211
      // Predicated region
      $region29: #{tpu_custom_call.1} parent=5 // pred_check
        _
      $region30: #{tpu_custom_call.1} parent=5 // pred_check_branch
        %214 = sbr.rel (%p211) target = $region32
      $region31: #{tpu_custom_call.1} parent=5 // pred_region
        %s215 = ssub.s32 %s14, 1
        // Predicated region
        $region33: #{tpu_custom_call.1} parent=31 // pred_check
          %p216 = pneg %p52
        $region34: #{tpu_custom_call.1} parent=31 // pred_check_branch
          %218 = sbr.rel (%p216) target = $region36
        $region35: #{tpu_custom_call.1} parent=31 // pred_region
          %219 = dma.done [#allocation4], 1024
        $region36: #{tpu_custom_call.1} parent=31 // pred_fallthru
          _
        %s220 = sand.u32 %s19, 1
        %s221 = scalar_lea.sflag [#allocation7], %s220
        %s222 = sand.u32 %s65, 1
        %s223 = smul.addr %s222, 1024
        %s224 = scalar_lea.vmem [#allocation6], %s223
        // Predicated region
        $region37: #{tpu_custom_call.1} parent=31 // pred_check
          %p225 = pneg %p78
        $region38: #{tpu_custom_call.1} parent=31 // pred_check_branch
          %227 = sbr.rel (%p225) target = $region40
        $region39: #{tpu_custom_call.1} parent=31 // pred_region
          %228 = dma.done %s221, 16384
        $region40: #{tpu_custom_call.1} parent=31 // pred_fallthru
          _
        %s229 = sand.u32 %s19, 1
        %s230 = scalar_lea.sflag [#allocation7], %s229
        %s231 = sand.u32 %s91, 1
        %s232 = smul.addr %s231, 1024
        %s233 = scalar_lea.vmem [#allocation8], %s232
        // Predicated region
        $region41: #{tpu_custom_call.1} parent=31 // pred_check
          %p234 = pneg %p104
        $region42: #{tpu_custom_call.1} parent=31 // pred_check_branch
          %236 = sbr.rel (%p234) target = $region44
        $region43: #{tpu_custom_call.1} parent=31 // pred_region
          %237 = dma.done %s230, 16384
        $region44: #{tpu_custom_call.1} parent=31 // pred_fallthru
          _
        %p238 = pneg %p52
        %p239 = pneg %p49
        %s240 = sand.u32 %s19, 1
        %s241 = scalar_lea.sflag [#allocation7], %s240
        %s242 = sand.u32 %s65, 1
        %s243 = smul.addr %s242, 1024
        %s244 = scalar_lea.vmem [#allocation6], %s243
        %p245 = pneg %p78
        %p246 = pneg %p75
        %s247 = sand.u32 %s19, 1
        %s248 = scalar_lea.sflag [#allocation7], %s247
        %s249 = sand.u32 %s91, 1
        %s250 = smul.addr %s249, 1024
        %s251 = scalar_lea.vmem [#allocation8], %s250
        %p252 = pneg %p104
        %p253 = pneg %p101
        %p254 = pneg %p130
        %p255 = pneg %p127
        %s256 = smul.u32 2, %s23
        %s257 = smul.u32 4, %s24
        %s258 = smul.u32 64, %s24
        %s259 = smul.u32 2, %s23
        %p260 = scmp.eq.s32.totalorder %s24, 0
        // Predicated region
        $region45: #{tpu_custom_call.1} parent=31 // pred_check
          %p261 = pneg %p260
        $region46: #{tpu_custom_call.1} parent=31 // pred_check_branch
          %263 = sbr.rel (%p261) target = $region48
        $region47: #{tpu_custom_call.1} parent=31 // pred_region
          %264 = vst [vmem:[#allocation2] sm:$0xff] 0.0
          %265 = vst [vmem:[#allocation2 + $0x8] sm:$0xff] 0.0
          %266 = vst [vmem:[#allocation2 + $0x10] sm:$0xff] 0.0
          %267 = vst [vmem:[#allocation2 + $0x18] sm:$0xff] 0.0
          %268 = vst [vmem:[#allocation2 + $0x20] sm:$0xff] 0.0
          %269 = vst [vmem:[#allocation2 + $0x28] sm:$0xff] 0.0
          %270 = vst [vmem:[#allocation2 + $0x30] sm:$0xff] 0.0
          %271 = vst [vmem:[#allocation2 + $0x38] sm:$0xff] 0.0
        $region48: #{tpu_custom_call.1} parent=31 // pred_fallthru
          _
        %v272 = vld [vmem:[#allocation3] sm:$0xff]
        %v273 = vld [vmem:[#allocation3 + $0x8] sm:$0xff]
        %v274 = vld [vmem:[#allocation3 + $0x10] sm:$0xff]
        %v275 = vld [vmem:[#allocation3 + $0x18] sm:$0xff]
        %v276 = vld [vmem:[#allocation3 + $0x20] sm:$0xff]
        %v277 = vld [vmem:[#allocation3 + $0x28] sm:$0xff]
        %v278 = vld [vmem:[#allocation3 + $0x30] sm:$0xff]
        %v279 = vld [vmem:[#allocation3 + $0x38] sm:$0xff]
        %v280 = vpack.c.bf16 %v276, %v272
        %v281 = vpack.c.bf16 %v277, %v273
        %v282 = vpack.c.bf16 %v278, %v274
        %v283 = vpack.c.bf16 %v279, %v275
        %v284 = vld [vmem:[%s224] sm:$0xff]
        %v285 = vld [vmem:[%s224 + $0x8] sm:$0xff]
        %v286 = vld [vmem:[%s224 + $0x10] sm:$0xff]
        %v287 = vld [vmem:[%s224 + $0x18] sm:$0xff]
        %v288 = vld [vmem:[%s224 + $0x20] sm:$0xff]
        %v289 = vld [vmem:[%s224 + $0x28] sm:$0xff]
        %v290 = vld [vmem:[%s224 + $0x30] sm:$0xff]
        %v291 = vld [vmem:[%s224 + $0x38] sm:$0xff]
        %v292 = vld [vmem:[%s224 + $0x40] sm:$0xff]
        %v293 = vld [vmem:[%s224 + $0x48] sm:$0xff]
        %v294 = vld [vmem:[%s224 + $0x50] sm:$0xff]
        %v295 = vld [vmem:[%s224 + $0x58] sm:$0xff]
        %v296 = vld [vmem:[%s224 + $0x60] sm:$0xff]
        %v297 = vld [vmem:[%s224 + $0x68] sm:$0xff]
        %v298 = vld [vmem:[%s224 + $0x70] sm:$0xff]
        %v299 = vld [vmem:[%s224 + $0x78] sm:$0xff]
        %v300 = vld [vmem:[%s224 + $0x80] sm:$0xff]
        %v301 = vld [vmem:[%s224 + $0x88] sm:$0xff]
        %v302 = vld [vmem:[%s224 + $0x90] sm:$0xff]
        %v303 = vld [vmem:[%s224 + $0x98] sm:$0xff]
        %v304 = vld [vmem:[%s224 + $0xa0] sm:$0xff]
        %v305 = vld [vmem:[%s224 + $0xa8] sm:$0xff]
        %v306 = vld [vmem:[%s224 + $0xb0] sm:$0xff]
        %v307 = vld [vmem:[%s224 + $0xb8] sm:$0xff]
        %v308 = vld [vmem:[%s224 + $0xc0] sm:$0xff]
        %v309 = vld [vmem:[%s224 + $0xc8] sm:$0xff]
        %v310 = vld [vmem:[%s224 + $0xd0] sm:$0xff]
        %v311 = vld [vmem:[%s224 + $0xd8] sm:$0xff]
        %v312 = vld [vmem:[%s224 + $0xe0] sm:$0xff]
        %v313 = vld [vmem:[%s224 + $0xe8] sm:$0xff]
        %v314 = vld [vmem:[%s224 + $0xf0] sm:$0xff]
        %v315 = vld [vmem:[%s224 + $0xf8] sm:$0xff]
        %v316 = vld [vmem:[%s224 + $0x100] sm:$0xff]
        %v317 = vld [vmem:[%s224 + $0x108] sm:$0xff]
        %v318 = vld [vmem:[%s224 + $0x110] sm:$0xff]
        %v319 = vld [vmem:[%s224 + $0x118] sm:$0xff]
        %v320 = vld [vmem:[%s224 + $0x120] sm:$0xff]
        %v321 = vld [vmem:[%s224 + $0x128] sm:$0xff]
        %v322 = vld [vmem:[%s224 + $0x130] sm:$0xff]
        %v323 = vld [vmem:[%s224 + $0x138] sm:$0xff]
        %v324 = vld [vmem:[%s224 + $0x140] sm:$0xff]
        %v325 = vld [vmem:[%s224 + $0x148] sm:$0xff]
        %v326 = vld [vmem:[%s224 + $0x150] sm:$0xff]
        %v327 = vld [vmem:[%s224 + $0x158] sm:$0xff]
        %v328 = vld [vmem:[%s224 + $0x160] sm:$0xff]
        %v329 = vld [vmem:[%s224 + $0x168] sm:$0xff]
        %v330 = vld [vmem:[%s224 + $0x170] sm:$0xff]
        %v331 = vld [vmem:[%s224 + $0x178] sm:$0xff]
        %v332 = vld [vmem:[%s224 + $0x180] sm:$0xff]
        %v333 = vld [vmem:[%s224 + $0x188] sm:$0xff]
        %v334 = vld [vmem:[%s224 + $0x190] sm:$0xff]
        %v335 = vld [vmem:[%s224 + $0x198] sm:$0xff]
        %v336 = vld [vmem:[%s224 + $0x1a0] sm:$0xff]
        %v337 = vld [vmem:[%s224 + $0x1a8] sm:$0xff]
        %v338 = vld [vmem:[%s224 + $0x1b0] sm:$0xff]
        %v339 = vld [vmem:[%s224 + $0x1b8] sm:$0xff]
        %v340 = vld [vmem:[%s224 + $0x1c0] sm:$0xff]
        %v341 = vld [vmem:[%s224 + $0x1c8] sm:$0xff]
        %v342 = vld [vmem:[%s224 + $0x1d0] sm:$0xff]
        %v343 = vld [vmem:[%s224 + $0x1d8] sm:$0xff]
        %v344 = vld [vmem:[%s224 + $0x1e0] sm:$0xff]
        %v345 = vld [vmem:[%s224 + $0x1e8] sm:$0xff]
        %v346 = vld [vmem:[%s224 + $0x1f0] sm:$0xff]
        %v347 = vld [vmem:[%s224 + $0x1f8] sm:$0xff]
        %v348 = vld [vmem:[%s224 + $0x200] sm:$0xff]
        %v349 = vld [vmem:[%s224 + $0x208] sm:$0xff]
        %v350 = vld [vmem:[%s224 + $0x210] sm:$0xff]
        %v351 = vld [vmem:[%s224 + $0x218] sm:$0xff]
        %v352 = vld [vmem:[%s224 + $0x220] sm:$0xff]
        %v353 = vld [vmem:[%s224 + $0x228] sm:$0xff]
        %v354 = vld [vmem:[%s224 + $0x230] sm:$0xff]
        %v355 = vld [vmem:[%s224 + $0x238] sm:$0xff]
        %v356 = vld [vmem:[%s224 + $0x240] sm:$0xff]
        %v357 = vld [vmem:[%s224 + $0x248] sm:$0xff]
        %v358 = vld [vmem:[%s224 + $0x250] sm:$0xff]
        %v359 = vld [vmem:[%s224 + $0x258] sm:$0xff]
        %v360 = vld [vmem:[%s224 + $0x260] sm:$0xff]
        %v361 = vld [vmem:[%s224 + $0x268] sm:$0xff]
        %v362 = vld [vmem:[%s224 + $0x270] sm:$0xff]
        %v363 = vld [vmem:[%s224 + $0x278] sm:$0xff]
        %v364 = vld [vmem:[%s224 + $0x280] sm:$0xff]
        %v365 = vld [vmem:[%s224 + $0x288] sm:$0xff]
        %v366 = vld [vmem:[%s224 + $0x290] sm:$0xff]
        %v367 = vld [vmem:[%s224 + $0x298] sm:$0xff]
        %v368 = vld [vmem:[%s224 + $0x2a0] sm:$0xff]
        %v369 = vld [vmem:[%s224 + $0x2a8] sm:$0xff]
        %v370 = vld [vmem:[%s224 + $0x2b0] sm:$0xff]
        %v371 = vld [vmem:[%s224 + $0x2b8] sm:$0xff]
        %v372 = vld [vmem:[%s224 + $0x2c0] sm:$0xff]
        %v373 = vld [vmem:[%s224 + $0x2c8] sm:$0xff]
        %v374 = vld [vmem:[%s224 + $0x2d0] sm:$0xff]
        %v375 = vld [vmem:[%s224 + $0x2d8] sm:$0xff]
        %v376 = vld [vmem:[%s224 + $0x2e0] sm:$0xff]
        %v377 = vld [vmem:[%s224 + $0x2e8] sm:$0xff]
        %v378 = vld [vmem:[%s224 + $0x2f0] sm:$0xff]
        %v379 = vld [vmem:[%s224 + $0x2f8] sm:$0xff]
        %v380 = vld [vmem:[%s224 + $0x300] sm:$0xff]
        %v381 = vld [vmem:[%s224 + $0x308] sm:$0xff]
        %v382 = vld [vmem:[%s224 + $0x310] sm:$0xff]
        %v383 = vld [vmem:[%s224 + $0x318] sm:$0xff]
        %v384 = vld [vmem:[%s224 + $0x320] sm:$0xff]
        %v385 = vld [vmem:[%s224 + $0x328] sm:$0xff]
        %v386 = vld [vmem:[%s224 + $0x330] sm:$0xff]
        %v387 = vld [vmem:[%s224 + $0x338] sm:$0xff]
        %v388 = vld [vmem:[%s224 + $0x340] sm:$0xff]
        %v389 = vld [vmem:[%s224 + $0x348] sm:$0xff]
        %v390 = vld [vmem:[%s224 + $0x350] sm:$0xff]
        %v391 = vld [vmem:[%s224 + $0x358] sm:$0xff]
        %v392 = vld [vmem:[%s224 + $0x360] sm:$0xff]
        %v393 = vld [vmem:[%s224 + $0x368] sm:$0xff]
        %v394 = vld [vmem:[%s224 + $0x370] sm:$0xff]
        %v395 = vld [vmem:[%s224 + $0x378] sm:$0xff]
        %v396 = vld [vmem:[%s224 + $0x380] sm:$0xff]
        %v397 = vld [vmem:[%s224 + $0x388] sm:$0xff]
        %v398 = vld [vmem:[%s224 + $0x390] sm:$0xff]
        %v399 = vld [vmem:[%s224 + $0x398] sm:$0xff]
        %v400 = vld [vmem:[%s224 + $0x3a0] sm:$0xff]
        %v401 = vld [vmem:[%s224 + $0x3a8] sm:$0xff]
        %v402 = vld [vmem:[%s224 + $0x3b0] sm:$0xff]
        %v403 = vld [vmem:[%s224 + $0x3b8] sm:$0xff]
        %v404 = vld [vmem:[%s224 + $0x3c0] sm:$0xff]
        %v405 = vld [vmem:[%s224 + $0x3c8] sm:$0xff]
        %v406 = vld [vmem:[%s224 + $0x3d0] sm:$0xff]
        %v407 = vld [vmem:[%s224 + $0x3d8] sm:$0xff]
        %v408 = vld [vmem:[%s224 + $0x3e0] sm:$0xff]
        %v409 = vld [vmem:[%s224 + $0x3e8] sm:$0xff]
        %v410 = vld [vmem:[%s224 + $0x3f0] sm:$0xff]
        %v411 = vld [vmem:[%s224 + $0x3f8] sm:$0xff]
        %v540 = vunpack.c.l.b16 %v284
        %v541 = vunpack.c.h.b16 %v284
        %v542 = vunpack.c.l.b16 %v285
        %v543 = vunpack.c.h.b16 %v285
        %v544 = vunpack.c.l.b16 %v286
        %v545 = vunpack.c.h.b16 %v286
        %v546 = vunpack.c.l.b16 %v287
        %v547 = vunpack.c.h.b16 %v287
        %v548 = vunpack.c.l.b16 %v288
        %v549 = vunpack.c.h.b16 %v288
        %v550 = vunpack.c.l.b16 %v289
        %v551 = vunpack.c.h.b16 %v289
        %v552 = vunpack.c.l.b16 %v290
        %v553 = vunpack.c.h.b16 %v290
        %v554 = vunpack.c.l.b16 %v291
        %v555 = vunpack.c.h.b16 %v291
        %v556 = vunpack.c.l.b16 %v292
        %v557 = vunpack.c.h.b16 %v292
        %v558 = vunpack.c.l.b16 %v293
        %v559 = vunpack.c.h.b16 %v293
        %v560 = vunpack.c.l.b16 %v294
        %v561 = vunpack.c.h.b16 %v294
        %v562 = vunpack.c.l.b16 %v295
        %v563 = vunpack.c.h.b16 %v295
        %v564 = vunpack.c.l.b16 %v296
        %v565 = vunpack.c.h.b16 %v296
        %v566 = vunpack.c.l.b16 %v297
        %v567 = vunpack.c.h.b16 %v297
        %v568 = vunpack.c.l.b16 %v298
        %v569 = vunpack.c.h.b16 %v298
        %v570 = vunpack.c.l.b16 %v299
        %v571 = vunpack.c.h.b16 %v299
        %v572 = vunpack.c.l.b16 %v300
        %v573 = vunpack.c.h.b16 %v300
        %v574 = vunpack.c.l.b16 %v301
        %v575 = vunpack.c.h.b16 %v301
        %v576 = vunpack.c.l.b16 %v302
        %v577 = vunpack.c.h.b16 %v302
        %v578 = vunpack.c.l.b16 %v303
        %v579 = vunpack.c.h.b16 %v303
        %v580 = vunpack.c.l.b16 %v304
        %v581 = vunpack.c.h.b16 %v304
        %v582 = vunpack.c.l.b16 %v305
        %v583 = vunpack.c.h.b16 %v305
        %v584 = vunpack.c.l.b16 %v306
        %v585 = vunpack.c.h.b16 %v306
        %v586 = vunpack.c.l.b16 %v307
        %v587 = vunpack.c.h.b16 %v307
        %v588 = vunpack.c.l.b16 %v308
        %v589 = vunpack.c.h.b16 %v308
        %v590 = vunpack.c.l.b16 %v309
        %v591 = vunpack.c.h.b16 %v309
        %v592 = vunpack.c.l.b16 %v310
        %v593 = vunpack.c.h.b16 %v310
        %v594 = vunpack.c.l.b16 %v311
        %v595 = vunpack.c.h.b16 %v311
        %v596 = vunpack.c.l.b16 %v312
        %v597 = vunpack.c.h.b16 %v312
        %v598 = vunpack.c.l.b16 %v313
        %v599 = vunpack.c.h.b16 %v313
        %v600 = vunpack.c.l.b16 %v314
        %v601 = vunpack.c.h.b16 %v314
        %v602 = vunpack.c.l.b16 %v315
        %v603 = vunpack.c.h.b16 %v315
        %v604 = vunpack.c.l.b16 %v316
        %v605 = vunpack.c.h.b16 %v316
        %v606 = vunpack.c.l.b16 %v317
        %v607 = vunpack.c.h.b16 %v317
        %v608 = vunpack.c.l.b16 %v318
        %v609 = vunpack.c.h.b16 %v318
        %v610 = vunpack.c.l.b16 %v319
        %v611 = vunpack.c.h.b16 %v319
        %v612 = vunpack.c.l.b16 %v320
        %v613 = vunpack.c.h.b16 %v320
        %v614 = vunpack.c.l.b16 %v321
        %v615 = vunpack.c.h.b16 %v321
        %v616 = vunpack.c.l.b16 %v322
        %v617 = vunpack.c.h.b16 %v322
        %v618 = vunpack.c.l.b16 %v323
        %v619 = vunpack.c.h.b16 %v323
        %v620 = vunpack.c.l.b16 %v324
        %v621 = vunpack.c.h.b16 %v324
        %v622 = vunpack.c.l.b16 %v325
        %v623 = vunpack.c.h.b16 %v325
        %v624 = vunpack.c.l.b16 %v326
        %v625 = vunpack.c.h.b16 %v326
        %v626 = vunpack.c.l.b16 %v327
        %v627 = vunpack.c.h.b16 %v327
        %v628 = vunpack.c.l.b16 %v328
        %v629 = vunpack.c.h.b16 %v328
        %v630 = vunpack.c.l.b16 %v329
        %v631 = vunpack.c.h.b16 %v329
        %v632 = vunpack.c.l.b16 %v330
        %v633 = vunpack.c.h.b16 %v330
        %v634 = vunpack.c.l.b16 %v331
        %v635 = vunpack.c.h.b16 %v331
        %v636 = vunpack.c.l.b16 %v332
        %v637 = vunpack.c.h.b16 %v332
        %v638 = vunpack.c.l.b16 %v333
        %v639 = vunpack.c.h.b16 %v333
        %v640 = vunpack.c.l.b16 %v334
        %v641 = vunpack.c.h.b16 %v334
        %v642 = vunpack.c.l.b16 %v335
        %v643 = vunpack.c.h.b16 %v335
        %v644 = vunpack.c.l.b16 %v336
        %v645 = vunpack.c.h.b16 %v336
        %v646 = vunpack.c.l.b16 %v337
        %v647 = vunpack.c.h.b16 %v337
        %v648 = vunpack.c.l.b16 %v338
        %v649 = vunpack.c.h.b16 %v338
        %v650 = vunpack.c.l.b16 %v339
        %v651 = vunpack.c.h.b16 %v339
        %v652 = vunpack.c.l.b16 %v340
        %v653 = vunpack.c.h.b16 %v340
        %v654 = vunpack.c.l.b16 %v341
        %v655 = vunpack.c.h.b16 %v341
        %v656 = vunpack.c.l.b16 %v342
        %v657 = vunpack.c.h.b16 %v342
        %v658 = vunpack.c.l.b16 %v343
        %v659 = vunpack.c.h.b16 %v343
        %v660 = vunpack.c.l.b16 %v344
        %v661 = vunpack.c.h.b16 %v344
        %v662 = vunpack.c.l.b16 %v345
        %v663 = vunpack.c.h.b16 %v345
        %v664 = vunpack.c.l.b16 %v346
        %v665 = vunpack.c.h.b16 %v346
        %v666 = vunpack.c.l.b16 %v347
        %v667 = vunpack.c.h.b16 %v347
        %v668 = vunpack.c.l.b16 %v348
        %v669 = vunpack.c.h.b16 %v348
        %v670 = vunpack.c.l.b16 %v349
        %v671 = vunpack.c.h.b16 %v349
        %v672 = vunpack.c.l.b16 %v350
        %v673 = vunpack.c.h.b16 %v350
        %v674 = vunpack.c.l.b16 %v351
        %v675 = vunpack.c.h.b16 %v351
        %v676 = vunpack.c.l.b16 %v352
        %v677 = vunpack.c.h.b16 %v352
        %v678 = vunpack.c.l.b16 %v353
        %v679 = vunpack.c.h.b16 %v353
        %v680 = vunpack.c.l.b16 %v354
        %v681 = vunpack.c.h.b16 %v354
        %v682 = vunpack.c.l.b16 %v355
        %v683 = vunpack.c.h.b16 %v355
        %v684 = vunpack.c.l.b16 %v356
        %v685 = vunpack.c.h.b16 %v356
        %v686 = vunpack.c.l.b16 %v357
        %v687 = vunpack.c.h.b16 %v357
        %v688 = vunpack.c.l.b16 %v358
        %v689 = vunpack.c.h.b16 %v358
        %v690 = vunpack.c.l.b16 %v359
        %v691 = vunpack.c.h.b16 %v359
        %v692 = vunpack.c.l.b16 %v360
        %v693 = vunpack.c.h.b16 %v360
        %v694 = vunpack.c.l.b16 %v361
        %v695 = vunpack.c.h.b16 %v361
        %v696 = vunpack.c.l.b16 %v362
        %v697 = vunpack.c.h.b16 %v362
        %v698 = vunpack.c.l.b16 %v363
        %v699 = vunpack.c.h.b16 %v363
        %v700 = vunpack.c.l.b16 %v364
        %v701 = vunpack.c.h.b16 %v364
        %v702 = vunpack.c.l.b16 %v365
        %v703 = vunpack.c.h.b16 %v365
        %v704 = vunpack.c.l.b16 %v366
        %v705 = vunpack.c.h.b16 %v366
        %v706 = vunpack.c.l.b16 %v367
        %v707 = vunpack.c.h.b16 %v367
        %v708 = vunpack.c.l.b16 %v368
        %v709 = vunpack.c.h.b16 %v368
        %v710 = vunpack.c.l.b16 %v369
        %v711 = vunpack.c.h.b16 %v369
        %v712 = vunpack.c.l.b16 %v370
        %v713 = vunpack.c.h.b16 %v370
        %v714 = vunpack.c.l.b16 %v371
        %v715 = vunpack.c.h.b16 %v371
        %v716 = vunpack.c.l.b16 %v372
        %v717 = vunpack.c.h.b16 %v372
        %v718 = vunpack.c.l.b16 %v373
        %v719 = vunpack.c.h.b16 %v373
        %v720 = vunpack.c.l.b16 %v374
        %v721 = vunpack.c.h.b16 %v374
        %v722 = vunpack.c.l.b16 %v375
        %v723 = vunpack.c.h.b16 %v375
        %v724 = vunpack.c.l.b16 %v376
        %v725 = vunpack.c.h.b16 %v376
        %v726 = vunpack.c.l.b16 %v377
        %v727 = vunpack.c.h.b16 %v377
        %v728 = vunpack.c.l.b16 %v378
        %v729 = vunpack.c.h.b16 %v378
        %v730 = vunpack.c.l.b16 %v379
        %v731 = vunpack.c.h.b16 %v379
        %v732 = vunpack.c.l.b16 %v380
        %v733 = vunpack.c.h.b16 %v380
        %v734 = vunpack.c.l.b16 %v381
        %v735 = vunpack.c.h.b16 %v381
        %v736 = vunpack.c.l.b16 %v382
        %v737 = vunpack.c.h.b16 %v382
        %v738 = vunpack.c.l.b16 %v383
        %v739 = vunpack.c.h.b16 %v383
        %v740 = vunpack.c.l.b16 %v384
        %v741 = vunpack.c.h.b16 %v384
        %v742 = vunpack.c.l.b16 %v385
        %v743 = vunpack.c.h.b16 %v385
        %v744 = vunpack.c.l.b16 %v386
        %v745 = vunpack.c.h.b16 %v386
        %v746 = vunpack.c.l.b16 %v387
        %v747 = vunpack.c.h.b16 %v387
        %v748 = vunpack.c.l.b16 %v388
        %v749 = vunpack.c.h.b16 %v388
        %v750 = vunpack.c.l.b16 %v389
        %v751 = vunpack.c.h.b16 %v389
        %v752 = vunpack.c.l.b16 %v390
        %v753 = vunpack.c.h.b16 %v390
        %v754 = vunpack.c.l.b16 %v391
        %v755 = vunpack.c.h.b16 %v391
        %v756 = vunpack.c.l.b16 %v392
        %v757 = vunpack.c.h.b16 %v392
        %v758 = vunpack.c.l.b16 %v393
        %v759 = vunpack.c.h.b16 %v393
        %v760 = vunpack.c.l.b16 %v394
        %v761 = vunpack.c.h.b16 %v394
        %v762 = vunpack.c.l.b16 %v395
        %v763 = vunpack.c.h.b16 %v395
        %v764 = vunpack.c.l.b16 %v396
        %v765 = vunpack.c.h.b16 %v396
        %v766 = vunpack.c.l.b16 %v397
        %v767 = vunpack.c.h.b16 %v397
        %v768 = vunpack.c.l.b16 %v398
        %v769 = vunpack.c.h.b16 %v398
        %v770 = vunpack.c.l.b16 %v399
        %v771 = vunpack.c.h.b16 %v399
        %v772 = vunpack.c.l.b16 %v400
        %v773 = vunpack.c.h.b16 %v400
        %v774 = vunpack.c.l.b16 %v401
        %v775 = vunpack.c.h.b16 %v401
        %v776 = vunpack.c.l.b16 %v402
        %v777 = vunpack.c.h.b16 %v402
        %v778 = vunpack.c.l.b16 %v403
        %v779 = vunpack.c.h.b16 %v403
        %v780 = vunpack.c.l.b16 %v404
        %v781 = vunpack.c.h.b16 %v404
        %v782 = vunpack.c.l.b16 %v405
        %v783 = vunpack.c.h.b16 %v405
        %v784 = vunpack.c.l.b16 %v406
        %v785 = vunpack.c.h.b16 %v406
        %v786 = vunpack.c.l.b16 %v407
        %v787 = vunpack.c.h.b16 %v407
        %v788 = vunpack.c.l.b16 %v408
        %v789 = vunpack.c.h.b16 %v408
        %v790 = vunpack.c.l.b16 %v409
        %v791 = vunpack.c.h.b16 %v409
        %v792 = vunpack.c.l.b16 %v410
        %v793 = vunpack.c.h.b16 %v410
        %v794 = vunpack.c.l.b16 %v411
        %v795 = vunpack.c.h.b16 %v411
        %v796 = vpack.c.b16 %v544, %v540
        %v797 = vpack.c.b16 %v545, %v541
        %v798 = vpack.c.b16 %v546, %v542
        %v799 = vpack.c.b16 %v547, %v543
        %v800 = vpack.c.b16 %v552, %v548
        %v801 = vpack.c.b16 %v553, %v549
        %v802 = vpack.c.b16 %v554, %v550
        %v803 = vpack.c.b16 %v555, %v551
        %v804 = vpack.c.b16 %v560, %v556
        %v805 = vpack.c.b16 %v561, %v557
        %v806 = vpack.c.b16 %v562, %v558
        %v807 = vpack.c.b16 %v563, %v559
        %v808 = vpack.c.b16 %v568, %v564
        %v809 = vpack.c.b16 %v569, %v565
        %v810 = vpack.c.b16 %v570, %v566
        %v811 = vpack.c.b16 %v571, %v567
        %v812 = vpack.c.b16 %v576, %v572
        %v813 = vpack.c.b16 %v577, %v573
        %v814 = vpack.c.b16 %v578, %v574
        %v815 = vpack.c.b16 %v579, %v575
        %v816 = vpack.c.b16 %v584, %v580
        %v817 = vpack.c.b16 %v585, %v581
        %v818 = vpack.c.b16 %v586, %v582
        %v819 = vpack.c.b16 %v587, %v583
        %v820 = vpack.c.b16 %v592, %v588
        %v821 = vpack.c.b16 %v593, %v589
        %v822 = vpack.c.b16 %v594, %v590
        %v823 = vpack.c.b16 %v595, %v591
        %v824 = vpack.c.b16 %v600, %v596
        %v825 = vpack.c.b16 %v601, %v597
        %v826 = vpack.c.b16 %v602, %v598
        %v827 = vpack.c.b16 %v603, %v599
        %v828 = vpack.c.b16 %v608, %v604
        %v829 = vpack.c.b16 %v609, %v605
        %v830 = vpack.c.b16 %v610, %v606
        %v831 = vpack.c.b16 %v611, %v607
        %v832 = vpack.c.b16 %v616, %v612
        %v833 = vpack.c.b16 %v617, %v613
        %v834 = vpack.c.b16 %v618, %v614
        %v835 = vpack.c.b16 %v619, %v615
        %v836 = vpack.c.b16 %v624, %v620
        %v837 = vpack.c.b16 %v625, %v621
        %v838 = vpack.c.b16 %v626, %v622
        %v839 = vpack.c.b16 %v627, %v623
        %v840 = vpack.c.b16 %v632, %v628
        %v841 = vpack.c.b16 %v633, %v629
        %v842 = vpack.c.b16 %v634, %v630
        %v843 = vpack.c.b16 %v635, %v631
        %v844 = vpack.c.b16 %v640, %v636
        %v845 = vpack.c.b16 %v641, %v637
        %v846 = vpack.c.b16 %v642, %v638
        %v847 = vpack.c.b16 %v643, %v639
        %v848 = vpack.c.b16 %v648, %v644
        %v849 = vpack.c.b16 %v649, %v645
        %v850 = vpack.c.b16 %v650, %v646
        %v851 = vpack.c.b16 %v651, %v647
        %v852 = vpack.c.b16 %v656, %v652
        %v853 = vpack.c.b16 %v657, %v653
        %v854 = vpack.c.b16 %v658, %v654
        %v855 = vpack.c.b16 %v659, %v655
        %v856 = vpack.c.b16 %v664, %v660
        %v857 = vpack.c.b16 %v665, %v661
        %v858 = vpack.c.b16 %v666, %v662
        %v859 = vpack.c.b16 %v667, %v663
        %v860 = vpack.c.b16 %v672, %v668
        %v861 = vpack.c.b16 %v673, %v669
        %v862 = vpack.c.b16 %v674, %v670
        %v863 = vpack.c.b16 %v675, %v671
        %v864 = vpack.c.b16 %v680, %v676
        %v865 = vpack.c.b16 %v681, %v677
        %v866 = vpack.c.b16 %v682, %v678
        %v867 = vpack.c.b16 %v683, %v679
        %v868 = vpack.c.b16 %v688, %v684
        %v869 = vpack.c.b16 %v689, %v685
        %v870 = vpack.c.b16 %v690, %v686
        %v871 = vpack.c.b16 %v691, %v687
        %v872 = vpack.c.b16 %v696, %v692
        %v873 = vpack.c.b16 %v697, %v693
        %v874 = vpack.c.b16 %v698, %v694
        %v875 = vpack.c.b16 %v699, %v695
        %v876 = vpack.c.b16 %v704, %v700
        %v877 = vpack.c.b16 %v705, %v701
        %v878 = vpack.c.b16 %v706, %v702
        %v879 = vpack.c.b16 %v707, %v703
        %v880 = vpack.c.b16 %v712, %v708
        %v881 = vpack.c.b16 %v713, %v709
        %v882 = vpack.c.b16 %v714, %v710
        %v883 = vpack.c.b16 %v715, %v711
        %v884 = vpack.c.b16 %v720, %v716
        %v885 = vpack.c.b16 %v721, %v717
        %v886 = vpack.c.b16 %v722, %v718
        %v887 = vpack.c.b16 %v723, %v719
        %v888 = vpack.c.b16 %v728, %v724
        %v889 = vpack.c.b16 %v729, %v725
        %v890 = vpack.c.b16 %v730, %v726
        %v891 = vpack.c.b16 %v731, %v727
        %v892 = vpack.c.b16 %v736, %v732
        %v893 = vpack.c.b16 %v737, %v733
        %v894 = vpack.c.b16 %v738, %v734
        %v895 = vpack.c.b16 %v739, %v735
        %v896 = vpack.c.b16 %v744, %v740
        %v897 = vpack.c.b16 %v745, %v741
        %v898 = vpack.c.b16 %v746, %v742
        %v899 = vpack.c.b16 %v747, %v743
        %v900 = vpack.c.b16 %v752, %v748
        %v901 = vpack.c.b16 %v753, %v749
        %v902 = vpack.c.b16 %v754, %v750
        %v903 = vpack.c.b16 %v755, %v751
        %v904 = vpack.c.b16 %v760, %v756
        %v905 = vpack.c.b16 %v761, %v757
        %v906 = vpack.c.b16 %v762, %v758
        %v907 = vpack.c.b16 %v763, %v759
        %v908 = vpack.c.b16 %v768, %v764
        %v909 = vpack.c.b16 %v769, %v765
        %v910 = vpack.c.b16 %v770, %v766
        %v911 = vpack.c.b16 %v771, %v767
        %v912 = vpack.c.b16 %v776, %v772
        %v913 = vpack.c.b16 %v777, %v773
        %v914 = vpack.c.b16 %v778, %v774
        %v915 = vpack.c.b16 %v779, %v775
        %v916 = vpack.c.b16 %v784, %v780
        %v917 = vpack.c.b16 %v785, %v781
        %v918 = vpack.c.b16 %v786, %v782
        %v919 = vpack.c.b16 %v787, %v783
        %v920 = vpack.c.b16 %v792, %v788
        %v921 = vpack.c.b16 %v793, %v789
        %v922 = vpack.c.b16 %v794, %v790
        %v923 = vpack.c.b16 %v795, %v791
        %1052 = vmatprep.subr.bf16.mxu0 %v825
        %1053 = vmatpush1.bf16.msra.mxu0 %v824
        %1054 = vmatprep.subr.bf16.mxu0 %v821
        %1055 = vmatpush1.bf16.msra.mxu0 %v820
        %1056 = vmatprep.subr.bf16.mxu0 %v817
        %1057 = vmatpush1.bf16.msra.mxu0 %v816
        %1058 = vmatprep.subr.bf16.mxu0 %v813
        %1059 = vmatpush1.bf16.msra.mxu0 %v812
        %1060 = vmatprep.subr.bf16.mxu0 %v809
        %1061 = vmatpush1.bf16.msra.mxu0 %v808
        %1062 = vmatprep.subr.bf16.mxu0 %v805
        %1063 = vmatpush1.bf16.msra.mxu0 %v804
        %1064 = vmatprep.subr.bf16.mxu0 %v801
        %1065 = vmatpush1.bf16.msra.mxu0 %v800
        %1066 = vmatprep.subr.bf16.mxu0 %v797
        %1067 = vmatpush1.bf16.msra.mxu0 %v796
        %1068 = vmatprep.subr.bf16.mxu0 %v857
        %1069 = vmatpush2.bf16.msra.mxu0 %v856
        %1070 = vmatprep.subr.bf16.mxu0 %v853
        %1071 = vmatpush2.bf16.msra.mxu0 %v852
        %1072 = vmatprep.subr.bf16.mxu0 %v849
        %1073 = vmatpush2.bf16.msra.mxu0 %v848
        %1074 = vmatprep.subr.bf16.mxu0 %v845
        %1075 = vmatpush2.bf16.msra.mxu0 %v844
        %1076 = vmatprep.subr.bf16.mxu0 %v841
        %1077 = vmatpush2.bf16.msra.mxu0 %v840
        %1078 = vmatprep.subr.bf16.mxu0 %v837
        %1079 = vmatpush2.bf16.msra.mxu0 %v836
        %1080 = vmatprep.subr.bf16.mxu0 %v833
        %1081 = vmatpush2.bf16.msra.mxu0 %v832
        %1082 = vmatprep.subr.bf16.mxu0 %v829
        %1083 = vmatpush2.bf16.msra.mxu0 %v828
        %1084 = vmatprep.mubr.bf16.mxu0 %v281
        %1085 = vmatmul.mubr.bf16.gmra.mxu0 %v280
        %v1086 = vpop.f32.mrf.mxu0
        %v1087 = vadd.f32 0.0, %v1086
        %v1088 = vpop.f32.mrf.mxu0
        %v1089 = vadd.f32 0.0, %v1088
        %v1090 = vpop.f32.mrf.mxu0
        %v1091 = vadd.f32 0.0, %v1090
        %v1092 = vpop.f32.mrf.mxu0
        %v1093 = vadd.f32 0.0, %v1092
        %1094 = vdwg.mxu0
        %1095 = vmatprep.subr.bf16.mxu0 %v889
        %1096 = vmatpush1.bf16.msra.mxu0 %v888
        %1097 = vmatprep.subr.bf16.mxu0 %v885
        %1098 = vmatpush1.bf16.msra.mxu0 %v884
        %1099 = vmatprep.subr.bf16.mxu0 %v881
        %1100 = vmatpush1.bf16.msra.mxu0 %v880
        %1101 = vmatprep.subr.bf16.mxu0 %v877
        %1102 = vmatpush1.bf16.msra.mxu0 %v876
        %1103 = vmatprep.subr.bf16.mxu0 %v873
        %1104 = vmatpush1.bf16.msra.mxu0 %v872
        %1105 = vmatprep.subr.bf16.mxu0 %v869
        %1106 = vmatpush1.bf16.msra.mxu0 %v868
        %1107 = vmatprep.subr.bf16.mxu0 %v865
        %1108 = vmatpush1.bf16.msra.mxu0 %v864
        %1109 = vmatprep.subr.bf16.mxu0 %v861
        %1110 = vmatpush1.bf16.msra.mxu0 %v860
        %1111 = vmatprep.subr.bf16.mxu0 %v921
        %1112 = vmatpush2.bf16.msra.mxu0 %v920
        %1113 = vmatprep.subr.bf16.mxu0 %v917
        %1114 = vmatpush2.bf16.msra.mxu0 %v916
        %1115 = vmatprep.subr.bf16.mxu0 %v913
        %1116 = vmatpush2.bf16.msra.mxu0 %v912
        %1117 = vmatprep.subr.bf16.mxu0 %v909
        %1118 = vmatpush2.bf16.msra.mxu0 %v908
        %1119 = vmatprep.subr.bf16.mxu0 %v905
        %1120 = vmatpush2.bf16.msra.mxu0 %v904
        %1121 = vmatprep.subr.bf16.mxu0 %v901
        %1122 = vmatpush2.bf16.msra.mxu0 %v900
        %1123 = vmatprep.subr.bf16.mxu0 %v897
        %1124 = vmatpush2.bf16.msra.mxu0 %v896
        %1125 = vmatprep.subr.bf16.mxu0 %v893
        %1126 = vmatpush2.bf16.msra.mxu0 %v892
        %1127 = vmatprep.mubr.bf16.mxu0 %v283
        %1128 = vmatmul.mubr.bf16.gmra.mxu0 %v282
        %v1129 = vpop.f32.mrf.mxu0
        %v1130 = vadd.f32 %v1087, %v1129
        %v1131 = vpop.f32.mrf.mxu0
        %v1132 = vadd.f32 %v1089, %v1131
        %v1133 = vpop.f32.mrf.mxu0
        %v1134 = vadd.f32 %v1091, %v1133
        %v1135 = vpop.f32.mrf.mxu0
        %v1136 = vadd.f32 %v1093, %v1135
        %1137 = vdwg.mxu0
        %1138 = vmatprep.subr.bf16.mxu0 %v827
        %1139 = vmatpush1.bf16.msra.mxu0 %v826
        %1140 = vmatprep.subr.bf16.mxu0 %v823
        %1141 = vmatpush1.bf16.msra.mxu0 %v822
        %1142 = vmatprep.subr.bf16.mxu0 %v819
        %1143 = vmatpush1.bf16.msra.mxu0 %v818
        %1144 = vmatprep.subr.bf16.mxu0 %v815
        %1145 = vmatpush1.bf16.msra.mxu0 %v814
        %1146 = vmatprep.subr.bf16.mxu0 %v811
        %1147 = vmatpush1.bf16.msra.mxu0 %v810
        %1148 = vmatprep.subr.bf16.mxu0 %v807
        %1149 = vmatpush1.bf16.msra.mxu0 %v806
        %1150 = vmatprep.subr.bf16.mxu0 %v803
        %1151 = vmatpush1.bf16.msra.mxu0 %v802
        %1152 = vmatprep.subr.bf16.mxu0 %v799
        %1153 = vmatpush1.bf16.msra.mxu0 %v798
        %1154 = vmatprep.subr.bf16.mxu0 %v859
        %1155 = vmatpush2.bf16.msra.mxu0 %v858
        %1156 = vmatprep.subr.bf16.mxu0 %v855
        %1157 = vmatpush2.bf16.msra.mxu0 %v854
        %1158 = vmatprep.subr.bf16.mxu0 %v851
        %1159 = vmatpush2.bf16.msra.mxu0 %v850
        %1160 = vmatprep.subr.bf16.mxu0 %v847
        %1161 = vmatpush2.bf16.msra.mxu0 %v846
        %1162 = vmatprep.subr.bf16.mxu0 %v843
        %1163 = vmatpush2.bf16.msra.mxu0 %v842
        %1164 = vmatprep.subr.bf16.mxu0 %v839
        %1165 = vmatpush2.bf16.msra.mxu0 %v838
        %1166 = vmatprep.subr.bf16.mxu0 %v835
        %1167 = vmatpush2.bf16.msra.mxu0 %v834
        %1168 = vmatprep.subr.bf16.mxu0 %v831
        %1169 = vmatpush2.bf16.msra.mxu0 %v830
        %1170 = vmatprep.mubr.bf16.mxu0 %v281
        %1171 = vmatmul.mubr.bf16.gmra.mxu0 %v280
        %v1172 = vpop.f32.mrf.mxu0
        %v1173 = vadd.f32 0.0, %v1172
        %v1174 = vpop.f32.mrf.mxu0
        %v1175 = vadd.f32 0.0, %v1174
        %v1176 = vpop.f32.mrf.mxu0
        %v1177 = vadd.f32 0.0, %v1176
        %v1178 = vpop.f32.mrf.mxu0
        %v1179 = vadd.f32 0.0, %v1178
        %1180 = vdwg.mxu0
        %1181 = vmatprep.subr.bf16.mxu0 %v891
        %1182 = vmatpush1.bf16.msra.mxu0 %v890
        %1183 = vmatprep.subr.bf16.mxu0 %v887
        %1184 = vmatpush1.bf16.msra.mxu0 %v886
        %1185 = vmatprep.subr.bf16.mxu0 %v883
        %1186 = vmatpush1.bf16.msra.mxu0 %v882
        %1187 = vmatprep.subr.bf16.mxu0 %v879
        %1188 = vmatpush1.bf16.msra.mxu0 %v878
        %1189 = vmatprep.subr.bf16.mxu0 %v875
        %1190 = vmatpush1.bf16.msra.mxu0 %v874
        %1191 = vmatprep.subr.bf16.mxu0 %v871
        %1192 = vmatpush1.bf16.msra.mxu0 %v870
        %1193 = vmatprep.subr.bf16.mxu0 %v867
        %1194 = vmatpush1.bf16.msra.mxu0 %v866
        %1195 = vmatprep.subr.bf16.mxu0 %v863
        %1196 = vmatpush1.bf16.msra.mxu0 %v862
        %1197 = vmatprep.subr.bf16.mxu0 %v923
        %1198 = vmatpush2.bf16.msra.mxu0 %v922
        %1199 = vmatprep.subr.bf16.mxu0 %v919
        %1200 = vmatpush2.bf16.msra.mxu0 %v918
        %1201 = vmatprep.subr.bf16.mxu0 %v915
        %1202 = vmatpush2.bf16.msra.mxu0 %v914
        %1203 = vmatprep.subr.bf16.mxu0 %v911
        %1204 = vmatpush2.bf16.msra.mxu0 %v910
        %1205 = vmatprep.subr.bf16.mxu0 %v907
        %1206 = vmatpush2.bf16.msra.mxu0 %v906
        %1207 = vmatprep.subr.bf16.mxu0 %v903
        %1208 = vmatpush2.bf16.msra.mxu0 %v902
        %1209 = vmatprep.subr.bf16.mxu0 %v899
        %1210 = vmatpush2.bf16.msra.mxu0 %v898
        %1211 = vmatprep.subr.bf16.mxu0 %v895
        %1212 = vmatpush2.bf16.msra.mxu0 %v894
        %1213 = vmatprep.mubr.bf16.mxu0 %v283
        %1214 = vmatmul.mubr.bf16.gmra.mxu0 %v282
        %v1215 = vpop.f32.mrf.mxu0
        %v1216 = vadd.f32 %v1173, %v1215
        %v1217 = vpop.f32.mrf.mxu0
        %v1218 = vadd.f32 %v1175, %v1217
        %v1219 = vpop.f32.mrf.mxu0
        %v1220 = vadd.f32 %v1177, %v1219
        %v1221 = vpop.f32.mrf.mxu0
        %v1222 = vadd.f32 %v1179, %v1221
        %1223 = vdwg.mxu0
        %v1224 = vmax.f32 %v1130, 0.0
        %v1225 = vmax.f32 %v1132, 0.0
        %v1226 = vmax.f32 %v1216, 0.0
        %v1227 = vmax.f32 %v1218, 0.0
        %v1228 = vmax.f32 %v1134, 0.0
        %v1229 = vmax.f32 %v1136, 0.0
        %v1230 = vmax.f32 %v1220, 0.0
        %v1231 = vmax.f32 %v1222, 0.0
        %v1232 = vld [vmem:[#allocation2] sm:$0xff]
        %v1233 = vld [vmem:[#allocation2 + $0x8] sm:$0xff]
        %v1234 = vld [vmem:[#allocation2 + $0x10] sm:$0xff]
        %v1235 = vld [vmem:[#allocation2 + $0x18] sm:$0xff]
        %v1236 = vld [vmem:[#allocation2 + $0x20] sm:$0xff]
        %v1237 = vld [vmem:[#allocation2 + $0x28] sm:$0xff]
        %v1238 = vld [vmem:[#allocation2 + $0x30] sm:$0xff]
        %v1239 = vld [vmem:[#allocation2 + $0x38] sm:$0xff]
        %v1240 = vpack.c.bf16 %v1228, %v1224
        %v1241 = vpack.c.bf16 %v1229, %v1225
        %v1242 = vpack.c.bf16 %v1230, %v1226
        %v1243 = vpack.c.bf16 %v1231, %v1227
        %v1244 = vld [vmem:[%s233] sm:$0xff]
        %v1245 = vld [vmem:[%s233 + $0x8] sm:$0xff]
        %v1246 = vld [vmem:[%s233 + $0x10] sm:$0xff]
        %v1247 = vld [vmem:[%s233 + $0x18] sm:$0xff]
        %v1248 = vld [vmem:[%s233 + $0x20] sm:$0xff]
        %v1249 = vld [vmem:[%s233 + $0x28] sm:$0xff]
        %v1250 = vld [vmem:[%s233 + $0x30] sm:$0xff]
        %v1251 = vld [vmem:[%s233 + $0x38] sm:$0xff]
        %v1252 = vld [vmem:[%s233 + $0x40] sm:$0xff]
        %v1253 = vld [vmem:[%s233 + $0x48] sm:$0xff]
        %v1254 = vld [vmem:[%s233 + $0x50] sm:$0xff]
        %v1255 = vld [vmem:[%s233 + $0x58] sm:$0xff]
        %v1256 = vld [vmem:[%s233 + $0x60] sm:$0xff]
        %v1257 = vld [vmem:[%s233 + $0x68] sm:$0xff]
        %v1258 = vld [vmem:[%s233 + $0x70] sm:$0xff]
        %v1259 = vld [vmem:[%s233 + $0x78] sm:$0xff]
        %v1260 = vld [vmem:[%s233 + $0x80] sm:$0xff]
        %v1261 = vld [vmem:[%s233 + $0x88] sm:$0xff]
        %v1262 = vld [vmem:[%s233 + $0x90] sm:$0xff]
        %v1263 = vld [vmem:[%s233 + $0x98] sm:$0xff]
        %v1264 = vld [vmem:[%s233 + $0xa0] sm:$0xff]
        %v1265 = vld [vmem:[%s233 + $0xa8] sm:$0xff]
        %v1266 = vld [vmem:[%s233 + $0xb0] sm:$0xff]
        %v1267 = vld [vmem:[%s233 + $0xb8] sm:$0xff]
        %v1268 = vld [vmem:[%s233 + $0xc0] sm:$0xff]
        %v1269 = vld [vmem:[%s233 + $0xc8] sm:$0xff]
        %v1270 = vld [vmem:[%s233 + $0xd0] sm:$0xff]
        %v1271 = vld [vmem:[%s233 + $0xd8] sm:$0xff]
        %v1272 = vld [vmem:[%s233 + $0xe0] sm:$0xff]
        %v1273 = vld [vmem:[%s233 + $0xe8] sm:$0xff]
        %v1274 = vld [vmem:[%s233 + $0xf0] sm:$0xff]
        %v1275 = vld [vmem:[%s233 + $0xf8] sm:$0xff]
        %v1276 = vld [vmem:[%s233 + $0x100] sm:$0xff]
        %v1277 = vld [vmem:[%s233 + $0x108] sm:$0xff]
        %v1278 = vld [vmem:[%s233 + $0x110] sm:$0xff]
        %v1279 = vld [vmem:[%s233 + $0x118] sm:$0xff]
        %v1280 = vld [vmem:[%s233 + $0x120] sm:$0xff]
        %v1281 = vld [vmem:[%s233 + $0x128] sm:$0xff]
        %v1282 = vld [vmem:[%s233 + $0x130] sm:$0xff]
        %v1283 = vld [vmem:[%s233 + $0x138] sm:$0xff]
        %v1284 = vld [vmem:[%s233 + $0x140] sm:$0xff]
        %v1285 = vld [vmem:[%s233 + $0x148] sm:$0xff]
        %v1286 = vld [vmem:[%s233 + $0x150] sm:$0xff]
        %v1287 = vld [vmem:[%s233 + $0x158] sm:$0xff]
        %v1288 = vld [vmem:[%s233 + $0x160] sm:$0xff]
        %v1289 = vld [vmem:[%s233 + $0x168] sm:$0xff]
        %v1290 = vld [vmem:[%s233 + $0x170] sm:$0xff]
        %v1291 = vld [vmem:[%s233 + $0x178] sm:$0xff]
        %v1292 = vld [vmem:[%s233 + $0x180] sm:$0xff]
        %v1293 = vld [vmem:[%s233 + $0x188] sm:$0xff]
        %v1294 = vld [vmem:[%s233 + $0x190] sm:$0xff]
        %v1295 = vld [vmem:[%s233 + $0x198] sm:$0xff]
        %v1296 = vld [vmem:[%s233 + $0x1a0] sm:$0xff]
        %v1297 = vld [vmem:[%s233 + $0x1a8] sm:$0xff]
        %v1298 = vld [vmem:[%s233 + $0x1b0] sm:$0xff]
        %v1299 = vld [vmem:[%s233 + $0x1b8] sm:$0xff]
        %v1300 = vld [vmem:[%s233 + $0x1c0] sm:$0xff]
        %v1301 = vld [vmem:[%s233 + $0x1c8] sm:$0xff]
        %v1302 = vld [vmem:[%s233 + $0x1d0] sm:$0xff]
        %v1303 = vld [vmem:[%s233 + $0x1d8] sm:$0xff]
        %v1304 = vld [vmem:[%s233 + $0x1e0] sm:$0xff]
        %v1305 = vld [vmem:[%s233 + $0x1e8] sm:$0xff]
        %v1306 = vld [vmem:[%s233 + $0x1f0] sm:$0xff]
        %v1307 = vld [vmem:[%s233 + $0x1f8] sm:$0xff]
        %v1308 = vld [vmem:[%s233 + $0x200] sm:$0xff]
        %v1309 = vld [vmem:[%s233 + $0x208] sm:$0xff]
        %v1310 = vld [vmem:[%s233 + $0x210] sm:$0xff]
        %v1311 = vld [vmem:[%s233 + $0x218] sm:$0xff]
        %v1312 = vld [vmem:[%s233 + $0x220] sm:$0xff]
        %v1313 = vld [vmem:[%s233 + $0x228] sm:$0xff]
        %v1314 = vld [vmem:[%s233 + $0x230] sm:$0xff]
        %v1315 = vld [vmem:[%s233 + $0x238] sm:$0xff]
        %v1316 = vld [vmem:[%s233 + $0x240] sm:$0xff]
        %v1317 = vld [vmem:[%s233 + $0x248] sm:$0xff]
        %v1318 = vld [vmem:[%s233 + $0x250] sm:$0xff]
        %v1319 = vld [vmem:[%s233 + $0x258] sm:$0xff]
        %v1320 = vld [vmem:[%s233 + $0x260] sm:$0xff]
        %v1321 = vld [vmem:[%s233 + $0x268] sm:$0xff]
        %v1322 = vld [vmem:[%s233 + $0x270] sm:$0xff]
        %v1323 = vld [vmem:[%s233 + $0x278] sm:$0xff]
        %v1324 = vld [vmem:[%s233 + $0x280] sm:$0xff]
        %v1325 = vld [vmem:[%s233 + $0x288] sm:$0xff]
        %v1326 = vld [vmem:[%s233 + $0x290] sm:$0xff]
        %v1327 = vld [vmem:[%s233 + $0x298] sm:$0xff]
        %v1328 = vld [vmem:[%s233 + $0x2a0] sm:$0xff]
        %v1329 = vld [vmem:[%s233 + $0x2a8] sm:$0xff]
        %v1330 = vld [vmem:[%s233 + $0x2b0] sm:$0xff]
        %v1331 = vld [vmem:[%s233 + $0x2b8] sm:$0xff]
        %v1332 = vld [vmem:[%s233 + $0x2c0] sm:$0xff]
        %v1333 = vld [vmem:[%s233 + $0x2c8] sm:$0xff]
        %v1334 = vld [vmem:[%s233 + $0x2d0] sm:$0xff]
        %v1335 = vld [vmem:[%s233 + $0x2d8] sm:$0xff]
        %v1336 = vld [vmem:[%s233 + $0x2e0] sm:$0xff]
        %v1337 = vld [vmem:[%s233 + $0x2e8] sm:$0xff]
        %v1338 = vld [vmem:[%s233 + $0x2f0] sm:$0xff]
        %v1339 = vld [vmem:[%s233 + $0x2f8] sm:$0xff]
        %v1340 = vld [vmem:[%s233 + $0x300] sm:$0xff]
        %v1341 = vld [vmem:[%s233 + $0x308] sm:$0xff]
        %v1342 = vld [vmem:[%s233 + $0x310] sm:$0xff]
        %v1343 = vld [vmem:[%s233 + $0x318] sm:$0xff]
        %v1344 = vld [vmem:[%s233 + $0x320] sm:$0xff]
        %v1345 = vld [vmem:[%s233 + $0x328] sm:$0xff]
        %v1346 = vld [vmem:[%s233 + $0x330] sm:$0xff]
        %v1347 = vld [vmem:[%s233 + $0x338] sm:$0xff]
        %v1348 = vld [vmem:[%s233 + $0x340] sm:$0xff]
        %v1349 = vld [vmem:[%s233 + $0x348] sm:$0xff]
        %v1350 = vld [vmem:[%s233 + $0x350] sm:$0xff]
        %v1351 = vld [vmem:[%s233 + $0x358] sm:$0xff]
        %v1352 = vld [vmem:[%s233 + $0x360] sm:$0xff]
        %v1353 = vld [vmem:[%s233 + $0x368] sm:$0xff]
        %v1354 = vld [vmem:[%s233 + $0x370] sm:$0xff]
        %v1355 = vld [vmem:[%s233 + $0x378] sm:$0xff]
        %v1356 = vld [vmem:[%s233 + $0x380] sm:$0xff]
        %v1357 = vld [vmem:[%s233 + $0x388] sm:$0xff]
        %v1358 = vld [vmem:[%s233 + $0x390] sm:$0xff]
        %v1359 = vld [vmem:[%s233 + $0x398] sm:$0xff]
        %v1360 = vld [vmem:[%s233 + $0x3a0] sm:$0xff]
        %v1361 = vld [vmem:[%s233 + $0x3a8] sm:$0xff]
        %v1362 = vld [vmem:[%s233 + $0x3b0] sm:$0xff]
        %v1363 = vld [vmem:[%s233 + $0x3b8] sm:$0xff]
        %v1364 = vld [vmem:[%s233 + $0x3c0] sm:$0xff]
        %v1365 = vld [vmem:[%s233 + $0x3c8] sm:$0xff]
        %v1366 = vld [vmem:[%s233 + $0x3d0] sm:$0xff]
        %v1367 = vld [vmem:[%s233 + $0x3d8] sm:$0xff]
        %v1368 = vld [vmem:[%s233 + $0x3e0] sm:$0xff]
        %v1369 = vld [vmem:[%s233 + $0x3e8] sm:$0xff]
        %v1370 = vld [vmem:[%s233 + $0x3f0] sm:$0xff]
        %v1371 = vld [vmem:[%s233 + $0x3f8] sm:$0xff]
        %v1500 = vunpack.c.l.b16 %v1244
        %v1501 = vunpack.c.h.b16 %v1244
        %v1502 = vunpack.c.l.b16 %v1245
        %v1503 = vunpack.c.h.b16 %v1245
        %v1504 = vunpack.c.l.b16 %v1246
        %v1505 = vunpack.c.h.b16 %v1246
        %v1506 = vunpack.c.l.b16 %v1247
        %v1507 = vunpack.c.h.b16 %v1247
        %v1508 = vunpack.c.l.b16 %v1248
        %v1509 = vunpack.c.h.b16 %v1248
        %v1510 = vunpack.c.l.b16 %v1249
        %v1511 = vunpack.c.h.b16 %v1249
        %v1512 = vunpack.c.l.b16 %v1250
        %v1513 = vunpack.c.h.b16 %v1250
        %v1514 = vunpack.c.l.b16 %v1251
        %v1515 = vunpack.c.h.b16 %v1251
        %v1516 = vunpack.c.l.b16 %v1252
        %v1517 = vunpack.c.h.b16 %v1252
        %v1518 = vunpack.c.l.b16 %v1253
        %v1519 = vunpack.c.h.b16 %v1253
        %v1520 = vunpack.c.l.b16 %v1254
        %v1521 = vunpack.c.h.b16 %v1254
        %v1522 = vunpack.c.l.b16 %v1255
        %v1523 = vunpack.c.h.b16 %v1255
        %v1524 = vunpack.c.l.b16 %v1256
        %v1525 = vunpack.c.h.b16 %v1256
        %v1526 = vunpack.c.l.b16 %v1257
        %v1527 = vunpack.c.h.b16 %v1257
        %v1528 = vunpack.c.l.b16 %v1258
        %v1529 = vunpack.c.h.b16 %v1258
        %v1530 = vunpack.c.l.b16 %v1259
        %v1531 = vunpack.c.h.b16 %v1259
        %v1532 = vunpack.c.l.b16 %v1260
        %v1533 = vunpack.c.h.b16 %v1260
        %v1534 = vunpack.c.l.b16 %v1261
        %v1535 = vunpack.c.h.b16 %v1261
        %v1536 = vunpack.c.l.b16 %v1262
        %v1537 = vunpack.c.h.b16 %v1262
        %v1538 = vunpack.c.l.b16 %v1263
        %v1539 = vunpack.c.h.b16 %v1263
        %v1540 = vunpack.c.l.b16 %v1264
        %v1541 = vunpack.c.h.b16 %v1264
        %v1542 = vunpack.c.l.b16 %v1265
        %v1543 = vunpack.c.h.b16 %v1265
        %v1544 = vunpack.c.l.b16 %v1266
        %v1545 = vunpack.c.h.b16 %v1266
        %v1546 = vunpack.c.l.b16 %v1267
        %v1547 = vunpack.c.h.b16 %v1267
        %v1548 = vunpack.c.l.b16 %v1268
        %v1549 = vunpack.c.h.b16 %v1268
        %v1550 = vunpack.c.l.b16 %v1269
        %v1551 = vunpack.c.h.b16 %v1269
        %v1552 = vunpack.c.l.b16 %v1270
        %v1553 = vunpack.c.h.b16 %v1270
        %v1554 = vunpack.c.l.b16 %v1271
        %v1555 = vunpack.c.h.b16 %v1271
        %v1556 = vunpack.c.l.b16 %v1272
        %v1557 = vunpack.c.h.b16 %v1272
        %v1558 = vunpack.c.l.b16 %v1273
        %v1559 = vunpack.c.h.b16 %v1273
        %v1560 = vunpack.c.l.b16 %v1274
        %v1561 = vunpack.c.h.b16 %v1274
        %v1562 = vunpack.c.l.b16 %v1275
        %v1563 = vunpack.c.h.b16 %v1275
        %v1564 = vunpack.c.l.b16 %v1276
        %v1565 = vunpack.c.h.b16 %v1276
        %v1566 = vunpack.c.l.b16 %v1277
        %v1567 = vunpack.c.h.b16 %v1277
        %v1568 = vunpack.c.l.b16 %v1278
        %v1569 = vunpack.c.h.b16 %v1278
        %v1570 = vunpack.c.l.b16 %v1279
        %v1571 = vunpack.c.h.b16 %v1279
        %v1572 = vunpack.c.l.b16 %v1280
        %v1573 = vunpack.c.h.b16 %v1280
        %v1574 = vunpack.c.l.b16 %v1281
        %v1575 = vunpack.c.h.b16 %v1281
        %v1576 = vunpack.c.l.b16 %v1282
        %v1577 = vunpack.c.h.b16 %v1282
        %v1578 = vunpack.c.l.b16 %v1283
        %v1579 = vunpack.c.h.b16 %v1283
        %v1580 = vunpack.c.l.b16 %v1284
        %v1581 = vunpack.c.h.b16 %v1284
        %v1582 = vunpack.c.l.b16 %v1285
        %v1583 = vunpack.c.h.b16 %v1285
        %v1584 = vunpack.c.l.b16 %v1286
        %v1585 = vunpack.c.h.b16 %v1286
        %v1586 = vunpack.c.l.b16 %v1287
        %v1587 = vunpack.c.h.b16 %v1287
        %v1588 = vunpack.c.l.b16 %v1288
        %v1589 = vunpack.c.h.b16 %v1288
        %v1590 = vunpack.c.l.b16 %v1289
        %v1591 = vunpack.c.h.b16 %v1289
        %v1592 = vunpack.c.l.b16 %v1290
        %v1593 = vunpack.c.h.b16 %v1290
        %v1594 = vunpack.c.l.b16 %v1291
        %v1595 = vunpack.c.h.b16 %v1291
        %v1596 = vunpack.c.l.b16 %v1292
        %v1597 = vunpack.c.h.b16 %v1292
        %v1598 = vunpack.c.l.b16 %v1293
        %v1599 = vunpack.c.h.b16 %v1293
        %v1600 = vunpack.c.l.b16 %v1294
        %v1601 = vunpack.c.h.b16 %v1294
        %v1602 = vunpack.c.l.b16 %v1295
        %v1603 = vunpack.c.h.b16 %v1295
        %v1604 = vunpack.c.l.b16 %v1296
        %v1605 = vunpack.c.h.b16 %v1296
        %v1606 = vunpack.c.l.b16 %v1297
        %v1607 = vunpack.c.h.b16 %v1297
        %v1608 = vunpack.c.l.b16 %v1298
        %v1609 = vunpack.c.h.b16 %v1298
        %v1610 = vunpack.c.l.b16 %v1299
        %v1611 = vunpack.c.h.b16 %v1299
        %v1612 = vunpack.c.l.b16 %v1300
        %v1613 = vunpack.c.h.b16 %v1300
        %v1614 = vunpack.c.l.b16 %v1301
        %v1615 = vunpack.c.h.b16 %v1301
        %v1616 = vunpack.c.l.b16 %v1302
        %v1617 = vunpack.c.h.b16 %v1302
        %v1618 = vunpack.c.l.b16 %v1303
        %v1619 = vunpack.c.h.b16 %v1303
        %v1620 = vunpack.c.l.b16 %v1304
        %v1621 = vunpack.c.h.b16 %v1304
        %v1622 = vunpack.c.l.b16 %v1305
        %v1623 = vunpack.c.h.b16 %v1305
        %v1624 = vunpack.c.l.b16 %v1306
        %v1625 = vunpack.c.h.b16 %v1306
        %v1626 = vunpack.c.l.b16 %v1307
        %v1627 = vunpack.c.h.b16 %v1307
        %v1628 = vunpack.c.l.b16 %v1308
        %v1629 = vunpack.c.h.b16 %v1308
        %v1630 = vunpack.c.l.b16 %v1309
        %v1631 = vunpack.c.h.b16 %v1309
        %v1632 = vunpack.c.l.b16 %v1310
        %v1633 = vunpack.c.h.b16 %v1310
        %v1634 = vunpack.c.l.b16 %v1311
        %v1635 = vunpack.c.h.b16 %v1311
        %v1636 = vunpack.c.l.b16 %v1312
        %v1637 = vunpack.c.h.b16 %v1312
        %v1638 = vunpack.c.l.b16 %v1313
        %v1639 = vunpack.c.h.b16 %v1313
        %v1640 = vunpack.c.l.b16 %v1314
        %v1641 = vunpack.c.h.b16 %v1314
        %v1642 = vunpack.c.l.b16 %v1315
        %v1643 = vunpack.c.h.b16 %v1315
        %v1644 = vunpack.c.l.b16 %v1316
        %v1645 = vunpack.c.h.b16 %v1316
        %v1646 = vunpack.c.l.b16 %v1317
        %v1647 = vunpack.c.h.b16 %v1317
        %v1648 = vunpack.c.l.b16 %v1318
        %v1649 = vunpack.c.h.b16 %v1318
        %v1650 = vunpack.c.l.b16 %v1319
        %v1651 = vunpack.c.h.b16 %v1319
        %v1652 = vunpack.c.l.b16 %v1320
        %v1653 = vunpack.c.h.b16 %v1320
        %v1654 = vunpack.c.l.b16 %v1321
        %v1655 = vunpack.c.h.b16 %v1321
        %v1656 = vunpack.c.l.b16 %v1322
        %v1657 = vunpack.c.h.b16 %v1322
        %v1658 = vunpack.c.l.b16 %v1323
        %v1659 = vunpack.c.h.b16 %v1323
        %v1660 = vunpack.c.l.b16 %v1324
        %v1661 = vunpack.c.h.b16 %v1324
        %v1662 = vunpack.c.l.b16 %v1325
        %v1663 = vunpack.c.h.b16 %v1325
        %v1664 = vunpack.c.l.b16 %v1326
        %v1665 = vunpack.c.h.b16 %v1326
        %v1666 = vunpack.c.l.b16 %v1327
        %v1667 = vunpack.c.h.b16 %v1327
        %v1668 = vunpack.c.l.b16 %v1328
        %v1669 = vunpack.c.h.b16 %v1328
        %v1670 = vunpack.c.l.b16 %v1329
        %v1671 = vunpack.c.h.b16 %v1329
        %v1672 = vunpack.c.l.b16 %v1330
        %v1673 = vunpack.c.h.b16 %v1330
        %v1674 = vunpack.c.l.b16 %v1331
        %v1675 = vunpack.c.h.b16 %v1331
        %v1676 = vunpack.c.l.b16 %v1332
        %v1677 = vunpack.c.h.b16 %v1332
        %v1678 = vunpack.c.l.b16 %v1333
        %v1679 = vunpack.c.h.b16 %v1333
        %v1680 = vunpack.c.l.b16 %v1334
        %v1681 = vunpack.c.h.b16 %v1334
        %v1682 = vunpack.c.l.b16 %v1335
        %v1683 = vunpack.c.h.b16 %v1335
        %v1684 = vunpack.c.l.b16 %v1336
        %v1685 = vunpack.c.h.b16 %v1336
        %v1686 = vunpack.c.l.b16 %v1337
        %v1687 = vunpack.c.h.b16 %v1337
        %v1688 = vunpack.c.l.b16 %v1338
        %v1689 = vunpack.c.h.b16 %v1338
        %v1690 = vunpack.c.l.b16 %v1339
        %v1691 = vunpack.c.h.b16 %v1339
        %v1692 = vunpack.c.l.b16 %v1340
        %v1693 = vunpack.c.h.b16 %v1340
        %v1694 = vunpack.c.l.b16 %v1341
        %v1695 = vunpack.c.h.b16 %v1341
        %v1696 = vunpack.c.l.b16 %v1342
        %v1697 = vunpack.c.h.b16 %v1342
        %v1698 = vunpack.c.l.b16 %v1343
        %v1699 = vunpack.c.h.b16 %v1343
        %v1700 = vunpack.c.l.b16 %v1344
        %v1701 = vunpack.c.h.b16 %v1344
        %v1702 = vunpack.c.l.b16 %v1345
        %v1703 = vunpack.c.h.b16 %v1345
        %v1704 = vunpack.c.l.b16 %v1346
        %v1705 = vunpack.c.h.b16 %v1346
        %v1706 = vunpack.c.l.b16 %v1347
        %v1707 = vunpack.c.h.b16 %v1347
        %v1708 = vunpack.c.l.b16 %v1348
        %v1709 = vunpack.c.h.b16 %v1348
        %v1710 = vunpack.c.l.b16 %v1349
        %v1711 = vunpack.c.h.b16 %v1349
        %v1712 = vunpack.c.l.b16 %v1350
        %v1713 = vunpack.c.h.b16 %v1350
        %v1714 = vunpack.c.l.b16 %v1351
        %v1715 = vunpack.c.h.b16 %v1351
        %v1716 = vunpack.c.l.b16 %v1352
        %v1717 = vunpack.c.h.b16 %v1352
        %v1718 = vunpack.c.l.b16 %v1353
        %v1719 = vunpack.c.h.b16 %v1353
        %v1720 = vunpack.c.l.b16 %v1354
        %v1721 = vunpack.c.h.b16 %v1354
        %v1722 = vunpack.c.l.b16 %v1355
        %v1723 = vunpack.c.h.b16 %v1355
        %v1724 = vunpack.c.l.b16 %v1356
        %v1725 = vunpack.c.h.b16 %v1356
        %v1726 = vunpack.c.l.b16 %v1357
        %v1727 = vunpack.c.h.b16 %v1357
        %v1728 = vunpack.c.l.b16 %v1358
        %v1729 = vunpack.c.h.b16 %v1358
        %v1730 = vunpack.c.l.b16 %v1359
        %v1731 = vunpack.c.h.b16 %v1359
        %v1732 = vunpack.c.l.b16 %v1360
        %v1733 = vunpack.c.h.b16 %v1360
        %v1734 = vunpack.c.l.b16 %v1361
        %v1735 = vunpack.c.h.b16 %v1361
        %v1736 = vunpack.c.l.b16 %v1362
        %v1737 = vunpack.c.h.b16 %v1362
        %v1738 = vunpack.c.l.b16 %v1363
        %v1739 = vunpack.c.h.b16 %v1363
        %v1740 = vunpack.c.l.b16 %v1364
        %v1741 = vunpack.c.h.b16 %v1364
        %v1742 = vunpack.c.l.b16 %v1365
        %v1743 = vunpack.c.h.b16 %v1365
        %v1744 = vunpack.c.l.b16 %v1366
        %v1745 = vunpack.c.h.b16 %v1366
        %v1746 = vunpack.c.l.b16 %v1367
        %v1747 = vunpack.c.h.b16 %v1367
        %v1748 = vunpack.c.l.b16 %v1368
        %v1749 = vunpack.c.h.b16 %v1368
        %v1750 = vunpack.c.l.b16 %v1369
        %v1751 = vunpack.c.h.b16 %v1369
        %v1752 = vunpack.c.l.b16 %v1370
        %v1753 = vunpack.c.h.b16 %v1370
        %v1754 = vunpack.c.l.b16 %v1371
        %v1755 = vunpack.c.h.b16 %v1371
        %v1756 = vpack.c.b16 %v1504, %v1500
        %v1757 = vpack.c.b16 %v1505, %v1501
        %v1758 = vpack.c.b16 %v1506, %v1502
        %v1759 = vpack.c.b16 %v1507, %v1503
        %v1760 = vpack.c.b16 %v1512, %v1508
        %v1761 = vpack.c.b16 %v1513, %v1509
        %v1762 = vpack.c.b16 %v1514, %v1510
        %v1763 = vpack.c.b16 %v1515, %v1511
        %v1764 = vpack.c.b16 %v1520, %v1516
        %v1765 = vpack.c.b16 %v1521, %v1517
        %v1766 = vpack.c.b16 %v1522, %v1518
        %v1767 = vpack.c.b16 %v1523, %v1519
        %v1768 = vpack.c.b16 %v1528, %v1524
        %v1769 = vpack.c.b16 %v1529, %v1525
        %v1770 = vpack.c.b16 %v1530, %v1526
        %v1771 = vpack.c.b16 %v1531, %v1527
        %v1772 = vpack.c.b16 %v1536, %v1532
        %v1773 = vpack.c.b16 %v1537, %v1533
        %v1774 = vpack.c.b16 %v1538, %v1534
        %v1775 = vpack.c.b16 %v1539, %v1535
        %v1776 = vpack.c.b16 %v1544, %v1540
        %v1777 = vpack.c.b16 %v1545, %v1541
        %v1778 = vpack.c.b16 %v1546, %v1542
        %v1779 = vpack.c.b16 %v1547, %v1543
        %v1780 = vpack.c.b16 %v1552, %v1548
        %v1781 = vpack.c.b16 %v1553, %v1549
        %v1782 = vpack.c.b16 %v1554, %v1550
        %v1783 = vpack.c.b16 %v1555, %v1551
        %v1784 = vpack.c.b16 %v1560, %v1556
        %v1785 = vpack.c.b16 %v1561, %v1557
        %v1786 = vpack.c.b16 %v1562, %v1558
        %v1787 = vpack.c.b16 %v1563, %v1559
        %v1788 = vpack.c.b16 %v1568, %v1564
        %v1789 = vpack.c.b16 %v1569, %v1565
        %v1790 = vpack.c.b16 %v1570, %v1566
        %v1791 = vpack.c.b16 %v1571, %v1567
        %v1792 = vpack.c.b16 %v1576, %v1572
        %v1793 = vpack.c.b16 %v1577, %v1573
        %v1794 = vpack.c.b16 %v1578, %v1574
        %v1795 = vpack.c.b16 %v1579, %v1575
        %v1796 = vpack.c.b16 %v1584, %v1580
        %v1797 = vpack.c.b16 %v1585, %v1581
        %v1798 = vpack.c.b16 %v1586, %v1582
        %v1799 = vpack.c.b16 %v1587, %v1583
        %v1800 = vpack.c.b16 %v1592, %v1588
        %v1801 = vpack.c.b16 %v1593, %v1589
        %v1802 = vpack.c.b16 %v1594, %v1590
        %v1803 = vpack.c.b16 %v1595, %v1591
        %v1804 = vpack.c.b16 %v1600, %v1596
        %v1805 = vpack.c.b16 %v1601, %v1597
        %v1806 = vpack.c.b16 %v1602, %v1598
        %v1807 = vpack.c.b16 %v1603, %v1599
        %v1808 = vpack.c.b16 %v1608, %v1604
        %v1809 = vpack.c.b16 %v1609, %v1605
        %v1810 = vpack.c.b16 %v1610, %v1606
        %v1811 = vpack.c.b16 %v1611, %v1607
        %v1812 = vpack.c.b16 %v1616, %v1612
        %v1813 = vpack.c.b16 %v1617, %v1613
        %v1814 = vpack.c.b16 %v1618, %v1614
        %v1815 = vpack.c.b16 %v1619, %v1615
        %v1816 = vpack.c.b16 %v1624, %v1620
        %v1817 = vpack.c.b16 %v1625, %v1621
        %v1818 = vpack.c.b16 %v1626, %v1622
        %v1819 = vpack.c.b16 %v1627, %v1623
        %v1820 = vpack.c.b16 %v1632, %v1628
        %v1821 = vpack.c.b16 %v1633, %v1629
        %v1822 = vpack.c.b16 %v1634, %v1630
        %v1823 = vpack.c.b16 %v1635, %v1631
        %v1824 = vpack.c.b16 %v1640, %v1636
        %v1825 = vpack.c.b16 %v1641, %v1637
        %v1826 = vpack.c.b16 %v1642, %v1638
        %v1827 = vpack.c.b16 %v1643, %v1639
        %v1828 = vpack.c.b16 %v1648, %v1644
        %v1829 = vpack.c.b16 %v1649, %v1645
        %v1830 = vpack.c.b16 %v1650, %v1646
        %v1831 = vpack.c.b16 %v1651, %v1647
        %v1832 = vpack.c.b16 %v1656, %v1652
        %v1833 = vpack.c.b16 %v1657, %v1653
        %v1834 = vpack.c.b16 %v1658, %v1654
        %v1835 = vpack.c.b16 %v1659, %v1655
        %v1836 = vpack.c.b16 %v1664, %v1660
        %v1837 = vpack.c.b16 %v1665, %v1661
        %v1838 = vpack.c.b16 %v1666, %v1662
        %v1839 = vpack.c.b16 %v1667, %v1663
        %v1840 = vpack.c.b16 %v1672, %v1668
        %v1841 = vpack.c.b16 %v1673, %v1669
        %v1842 = vpack.c.b16 %v1674, %v1670
        %v1843 = vpack.c.b16 %v1675, %v1671
        %v1844 = vpack.c.b16 %v1680, %v1676
        %v1845 = vpack.c.b16 %v1681, %v1677
        %v1846 = vpack.c.b16 %v1682, %v1678
        %v1847 = vpack.c.b16 %v1683, %v1679
        %v1848 = vpack.c.b16 %v1688, %v1684
        %v1849 = vpack.c.b16 %v1689, %v1685
        %v1850 = vpack.c.b16 %v1690, %v1686
        %v1851 = vpack.c.b16 %v1691, %v1687
        %v1852 = vpack.c.b16 %v1696, %v1692
        %v1853 = vpack.c.b16 %v1697, %v1693
        %v1854 = vpack.c.b16 %v1698, %v1694
        %v1855 = vpack.c.b16 %v1699, %v1695
        %v1856 = vpack.c.b16 %v1704, %v1700
        %v1857 = vpack.c.b16 %v1705, %v1701
        %v1858 = vpack.c.b16 %v1706, %v1702
        %v1859 = vpack.c.b16 %v1707, %v1703
        %v1860 = vpack.c.b16 %v1712, %v1708
        %v1861 = vpack.c.b16 %v1713, %v1709
        %v1862 = vpack.c.b16 %v1714, %v1710
        %v1863 = vpack.c.b16 %v1715, %v1711
        %v1864 = vpack.c.b16 %v1720, %v1716
        %v1865 = vpack.c.b16 %v1721, %v1717
        %v1866 = vpack.c.b16 %v1722, %v1718
        %v1867 = vpack.c.b16 %v1723, %v1719
        %v1868 = vpack.c.b16 %v1728, %v1724
        %v1869 = vpack.c.b16 %v1729, %v1725
        %v1870 = vpack.c.b16 %v1730, %v1726
        %v1871 = vpack.c.b16 %v1731, %v1727
        %v1872 = vpack.c.b16 %v1736, %v1732
        %v1873 = vpack.c.b16 %v1737, %v1733
        %v1874 = vpack.c.b16 %v1738, %v1734
        %v1875 = vpack.c.b16 %v1739, %v1735
        %v1876 = vpack.c.b16 %v1744, %v1740
        %v1877 = vpack.c.b16 %v1745, %v1741
        %v1878 = vpack.c.b16 %v1746, %v1742
        %v1879 = vpack.c.b16 %v1747, %v1743
        %v1880 = vpack.c.b16 %v1752, %v1748
        %v1881 = vpack.c.b16 %v1753, %v1749
        %v1882 = vpack.c.b16 %v1754, %v1750
        %v1883 = vpack.c.b16 %v1755, %v1751
        %2012 = vmatprep.subr.bf16.mxu0 %v1785
        %2013 = vmatpush1.bf16.msra.mxu0 %v1784
        %2014 = vmatprep.subr.bf16.mxu0 %v1781
        %2015 = vmatpush1.bf16.msra.mxu0 %v1780
        %2016 = vmatprep.subr.bf16.mxu0 %v1777
        %2017 = vmatpush1.bf16.msra.mxu0 %v1776
        %2018 = vmatprep.subr.bf16.mxu0 %v1773
        %2019 = vmatpush1.bf16.msra.mxu0 %v1772
        %2020 = vmatprep.subr.bf16.mxu0 %v1769
        %2021 = vmatpush1.bf16.msra.mxu0 %v1768
        %2022 = vmatprep.subr.bf16.mxu0 %v1765
        %2023 = vmatpush1.bf16.msra.mxu0 %v1764
        %2024 = vmatprep.subr.bf16.mxu0 %v1761
        %2025 = vmatpush1.bf16.msra.mxu0 %v1760
        %2026 = vmatprep.subr.bf16.mxu0 %v1757
        %2027 = vmatpush1.bf16.msra.mxu0 %v1756
        %2028 = vmatprep.subr.bf16.mxu0 %v1817
        %2029 = vmatpush2.bf16.msra.mxu0 %v1816
        %2030 = vmatprep.subr.bf16.mxu0 %v1813
        %2031 = vmatpush2.bf16.msra.mxu0 %v1812
        %2032 = vmatprep.subr.bf16.mxu0 %v1809
        %2033 = vmatpush2.bf16.msra.mxu0 %v1808
        %2034 = vmatprep.subr.bf16.mxu0 %v1805
        %2035 = vmatpush2.bf16.msra.mxu0 %v1804
        %2036 = vmatprep.subr.bf16.mxu0 %v1801
        %2037 = vmatpush2.bf16.msra.mxu0 %v1800
        %2038 = vmatprep.subr.bf16.mxu0 %v1797
        %2039 = vmatpush2.bf16.msra.mxu0 %v1796
        %2040 = vmatprep.subr.bf16.mxu0 %v1793
        %2041 = vmatpush2.bf16.msra.mxu0 %v1792
        %2042 = vmatprep.subr.bf16.mxu0 %v1789
        %2043 = vmatpush2.bf16.msra.mxu0 %v1788
        %2044 = vmatprep.mubr.bf16.mxu0 %v1241
        %2045 = vmatmul.mubr.bf16.gmra.mxu0 %v1240
        %v2046 = vpop.f32.mrf.mxu0
        %v2047 = vadd.f32 0.0, %v2046
        %v2048 = vpop.f32.mrf.mxu0
        %v2049 = vadd.f32 0.0, %v2048
        %v2050 = vpop.f32.mrf.mxu0
        %v2051 = vadd.f32 0.0, %v2050
        %v2052 = vpop.f32.mrf.mxu0
        %v2053 = vadd.f32 0.0, %v2052
        %2054 = vdwg.mxu0
        %2055 = vmatprep.subr.bf16.mxu0 %v1849
        %2056 = vmatpush1.bf16.msra.mxu0 %v1848
        %2057 = vmatprep.subr.bf16.mxu0 %v1845
        %2058 = vmatpush1.bf16.msra.mxu0 %v1844
        %2059 = vmatprep.subr.bf16.mxu0 %v1841
        %2060 = vmatpush1.bf16.msra.mxu0 %v1840
        %2061 = vmatprep.subr.bf16.mxu0 %v1837
        %2062 = vmatpush1.bf16.msra.mxu0 %v1836
        %2063 = vmatprep.subr.bf16.mxu0 %v1833
        %2064 = vmatpush1.bf16.msra.mxu0 %v1832
        %2065 = vmatprep.subr.bf16.mxu0 %v1829
        %2066 = vmatpush1.bf16.msra.mxu0 %v1828
        %2067 = vmatprep.subr.bf16.mxu0 %v1825
        %2068 = vmatpush1.bf16.msra.mxu0 %v1824
        %2069 = vmatprep.subr.bf16.mxu0 %v1821
        %2070 = vmatpush1.bf16.msra.mxu0 %v1820
        %2071 = vmatprep.subr.bf16.mxu0 %v1881
        %2072 = vmatpush2.bf16.msra.mxu0 %v1880
        %2073 = vmatprep.subr.bf16.mxu0 %v1877
        %2074 = vmatpush2.bf16.msra.mxu0 %v1876
        %2075 = vmatprep.subr.bf16.mxu0 %v1873
        %2076 = vmatpush2.bf16.msra.mxu0 %v1872
        %2077 = vmatprep.subr.bf16.mxu0 %v1869
        %2078 = vmatpush2.bf16.msra.mxu0 %v1868
        %2079 = vmatprep.subr.bf16.mxu0 %v1865
        %2080 = vmatpush2.bf16.msra.mxu0 %v1864
        %2081 = vmatprep.subr.bf16.mxu0 %v1861
        %2082 = vmatpush2.bf16.msra.mxu0 %v1860
        %2083 = vmatprep.subr.bf16.mxu0 %v1857
        %2084 = vmatpush2.bf16.msra.mxu0 %v1856
        %2085 = vmatprep.subr.bf16.mxu0 %v1853
        %2086 = vmatpush2.bf16.msra.mxu0 %v1852
        %2087 = vmatprep.mubr.bf16.mxu0 %v1243
        %2088 = vmatmul.mubr.bf16.gmra.mxu0 %v1242
        %v2089 = vpop.f32.mrf.mxu0
        %v2090 = vadd.f32 %v2047, %v2089
        %v2091 = vpop.f32.mrf.mxu0
        %v2092 = vadd.f32 %v2049, %v2091
        %v2093 = vpop.f32.mrf.mxu0
        %v2094 = vadd.f32 %v2051, %v2093
        %v2095 = vpop.f32.mrf.mxu0
        %v2096 = vadd.f32 %v2053, %v2095
        %2097 = vdwg.mxu0
        %2098 = vmatprep.subr.bf16.mxu0 %v1787
        %2099 = vmatpush1.bf16.msra.mxu0 %v1786
        %2100 = vmatprep.subr.bf16.mxu0 %v1783
        %2101 = vmatpush1.bf16.msra.mxu0 %v1782
        %2102 = vmatprep.subr.bf16.mxu0 %v1779
        %2103 = vmatpush1.bf16.msra.mxu0 %v1778
        %2104 = vmatprep.subr.bf16.mxu0 %v1775
        %2105 = vmatpush1.bf16.msra.mxu0 %v1774
        %2106 = vmatprep.subr.bf16.mxu0 %v1771
        %2107 = vmatpush1.bf16.msra.mxu0 %v1770
        %2108 = vmatprep.subr.bf16.mxu0 %v1767
        %2109 = vmatpush1.bf16.msra.mxu0 %v1766
        %2110 = vmatprep.subr.bf16.mxu0 %v1763
        %2111 = vmatpush1.bf16.msra.mxu0 %v1762
        %2112 = vmatprep.subr.bf16.mxu0 %v1759
        %2113 = vmatpush1.bf16.msra.mxu0 %v1758
        %2114 = vmatprep.subr.bf16.mxu0 %v1819
        %2115 = vmatpush2.bf16.msra.mxu0 %v1818
        %2116 = vmatprep.subr.bf16.mxu0 %v1815
        %2117 = vmatpush2.bf16.msra.mxu0 %v1814
        %2118 = vmatprep.subr.bf16.mxu0 %v1811
        %2119 = vmatpush2.bf16.msra.mxu0 %v1810
        %2120 = vmatprep.subr.bf16.mxu0 %v1807
        %2121 = vmatpush2.bf16.msra.mxu0 %v1806
        %2122 = vmatprep.subr.bf16.mxu0 %v1803
        %2123 = vmatpush2.bf16.msra.mxu0 %v1802
        %2124 = vmatprep.subr.bf16.mxu0 %v1799
        %2125 = vmatpush2.bf16.msra.mxu0 %v1798
        %2126 = vmatprep.subr.bf16.mxu0 %v1795
        %2127 = vmatpush2.bf16.msra.mxu0 %v1794
        %2128 = vmatprep.subr.bf16.mxu0 %v1791
        %2129 = vmatpush2.bf16.msra.mxu0 %v1790
        %2130 = vmatprep.mubr.bf16.mxu0 %v1241
        %2131 = vmatmul.mubr.bf16.gmra.mxu0 %v1240
        %v2132 = vpop.f32.mrf.mxu0
        %v2133 = vadd.f32 0.0, %v2132
        %v2134 = vpop.f32.mrf.mxu0
        %v2135 = vadd.f32 0.0, %v2134
        %v2136 = vpop.f32.mrf.mxu0
        %v2137 = vadd.f32 0.0, %v2136
        %v2138 = vpop.f32.mrf.mxu0
        %v2139 = vadd.f32 0.0, %v2138
        %2140 = vdwg.mxu0
        %2141 = vmatprep.subr.bf16.mxu0 %v1851
        %2142 = vmatpush1.bf16.msra.mxu0 %v1850
        %2143 = vmatprep.subr.bf16.mxu0 %v1847
        %2144 = vmatpush1.bf16.msra.mxu0 %v1846
        %2145 = vmatprep.subr.bf16.mxu0 %v1843
        %2146 = vmatpush1.bf16.msra.mxu0 %v1842
        %2147 = vmatprep.subr.bf16.mxu0 %v1839
        %2148 = vmatpush1.bf16.msra.mxu0 %v1838
        %2149 = vmatprep.subr.bf16.mxu0 %v1835
        %2150 = vmatpush1.bf16.msra.mxu0 %v1834
        %2151 = vmatprep.subr.bf16.mxu0 %v1831
        %2152 = vmatpush1.bf16.msra.mxu0 %v1830
        %2153 = vmatprep.subr.bf16.mxu0 %v1827
        %2154 = vmatpush1.bf16.msra.mxu0 %v1826
        %2155 = vmatprep.subr.bf16.mxu0 %v1823
        %2156 = vmatpush1.bf16.msra.mxu0 %v1822
        %2157 = vmatprep.subr.bf16.mxu0 %v1883
        %2158 = vmatpush2.bf16.msra.mxu0 %v1882
        %2159 = vmatprep.subr.bf16.mxu0 %v1879
        %2160 = vmatpush2.bf16.msra.mxu0 %v1878
        %2161 = vmatprep.subr.bf16.mxu0 %v1875
        %2162 = vmatpush2.bf16.msra.mxu0 %v1874
        %2163 = vmatprep.subr.bf16.mxu0 %v1871
        %2164 = vmatpush2.bf16.msra.mxu0 %v1870
        %2165 = vmatprep.subr.bf16.mxu0 %v1867
        %2166 = vmatpush2.bf16.msra.mxu0 %v1866
        %2167 = vmatprep.subr.bf16.mxu0 %v1863
        %2168 = vmatpush2.bf16.msra.mxu0 %v1862
        %2169 = vmatprep.subr.bf16.mxu0 %v1859
        %2170 = vmatpush2.bf16.msra.mxu0 %v1858
        %2171 = vmatprep.subr.bf16.mxu0 %v1855
        %2172 = vmatpush2.bf16.msra.mxu0 %v1854
        %2173 = vmatprep.mubr.bf16.mxu0 %v1243
        %2174 = vmatmul.mubr.bf16.gmra.mxu0 %v1242
        %v2175 = vpop.f32.mrf.mxu0
        %v2176 = vadd.f32 %v2133, %v2175
        %v2177 = vpop.f32.mrf.mxu0
        %v2178 = vadd.f32 %v2135, %v2177
        %v2179 = vpop.f32.mrf.mxu0
        %v2180 = vadd.f32 %v2137, %v2179
        %v2181 = vpop.f32.mrf.mxu0
        %v2182 = vadd.f32 %v2139, %v2181
        %2183 = vdwg.mxu0
        %v2184 = vadd.f32 %v1232, %v2090
        %v2185 = vadd.f32 %v1233, %v2092
        %v2186 = vadd.f32 %v1234, %v2176
        %v2187 = vadd.f32 %v1235, %v2178
        %v2188 = vadd.f32 %v1236, %v2094
        %v2189 = vadd.f32 %v1237, %v2096
        %v2190 = vadd.f32 %v1238, %v2180
        %v2191 = vadd.f32 %v1239, %v2182
        %2192 = vst [vmem:[#allocation2] sm:$0xff] %v2184
        %2193 = vst [vmem:[#allocation2 + $0x8] sm:$0xff] %v2185
        %2194 = vst [vmem:[#allocation2 + $0x10] sm:$0xff] %v2186
        %2195 = vst [vmem:[#allocation2 + $0x18] sm:$0xff] %v2187
        %2196 = vst [vmem:[#allocation2 + $0x20] sm:$0xff] %v2188
        %2197 = vst [vmem:[#allocation2 + $0x28] sm:$0xff] %v2189
        %2198 = vst [vmem:[#allocation2 + $0x30] sm:$0xff] %v2190
        %2199 = vst [vmem:[#allocation2 + $0x38] sm:$0xff] %v2191
        %p2200 = scmp.eq.s32.totalorder %s24, 3
        // Predicated region
        $region49: #{tpu_custom_call.1} parent=31 // pred_check
          %p2201 = pneg %p2200
        $region50: #{tpu_custom_call.1} parent=31 // pred_check_branch
          %2203 = sbr.rel (%p2201) target = $region52
        $region51: #{tpu_custom_call.1} parent=31 // pred_region
          %v2204 = vld [vmem:[#allocation2] sm:$0xff]
          %v2205 = vld [vmem:[#allocation2 + $0x8] sm:$0xff]
          %v2206 = vld [vmem:[#allocation2 + $0x10] sm:$0xff]
          %v2207 = vld [vmem:[#allocation2 + $0x18] sm:$0xff]
          %v2208 = vld [vmem:[#allocation2 + $0x20] sm:$0xff]
          %v2209 = vld [vmem:[#allocation2 + $0x28] sm:$0xff]
          %v2210 = vld [vmem:[#allocation2 + $0x30] sm:$0xff]
          %v2211 = vld [vmem:[#allocation2 + $0x38] sm:$0xff]
          %v2212 = vadd.f32 %v2204, %v272
          %v2213 = vadd.f32 %v2205, %v273
          %v2214 = vadd.f32 %v2206, %v274
          %v2215 = vadd.f32 %v2207, %v275
          %v2216 = vadd.f32 %v2208, %v276
          %v2217 = vadd.f32 %v2209, %v277
          %v2218 = vadd.f32 %v2210, %v278
          %v2219 = vadd.f32 %v2211, %v279
          %v2220 = vadd.f32 %v2212, %v2213
          %v2221 = vadd.f32 %v2220, %v2214
          %v2222 = vadd.f32 %v2221, %v2215
          %2223 = vadd.xlane.f32.xlu0 %v2222
          %v2224 = vpop.xlane.xlu0 %2223
          %v2225 = vadd.f32 %v2216, %v2217
          %v2226 = vadd.f32 %v2225, %v2218
          %v2227 = vadd.f32 %v2226, %v2219
          %2228 = vadd.xlane.f32.xlu0 %v2227
          %v2229 = vpop.xlane.xlu0 %2228
          %v2230 = vrcp.pop 512.0
          %v2231 = vmul.f32 %v2224, %v2230
          %v2232 = vmul.f32 %v2229, %v2230
          %v2233 = vsub.f32 %v2212, %v2231
          %v2234 = vsub.f32 %v2213, %v2231
          %v2235 = vsub.f32 %v2214, %v2231
          %v2236 = vsub.f32 %v2215, %v2231
          %v2237 = vsub.f32 %v2216, %v2232
          %v2238 = vsub.f32 %v2217, %v2232
          %v2239 = vsub.f32 %v2218, %v2232
          %v2240 = vsub.f32 %v2219, %v2232
          %v2241 = vmul.f32 %v2233, %v2233
          %v2242 = vmul.f32 %v2234, %v2234
          %v2243 = vmul.f32 %v2235, %v2235
          %v2244 = vmul.f32 %v2236, %v2236
          %v2245 = vmul.f32 %v2237, %v2237
          %v2246 = vmul.f32 %v2238, %v2238
          %v2247 = vmul.f32 %v2239, %v2239
          %v2248 = vmul.f32 %v2240, %v2240
          %v2249 = vadd.f32 %v2241, %v2242
          %v2250 = vadd.f32 %v2249, %v2243
          %v2251 = vadd.f32 %v2250, %v2244
          %2252 = vadd.xlane.f32.xlu0 %v2251
          %v2253 = vpop.xlane.xlu0 %2252
          %v2254 = vadd.f32 %v2245, %v2246
          %v2255 = vadd.f32 %v2254, %v2247
          %v2256 = vadd.f32 %v2255, %v2248
          %2257 = vadd.xlane.f32.xlu0 %v2256
          %v2258 = vpop.xlane.xlu0 %2257
          %v2259 = vmul.f32 %v2253, %v2230
          %v2260 = vmul.f32 %v2258, %v2230
          %v2261 = vadd.f32 %v2259, 1e-05
          %v2262 = vadd.f32 %v2260, 1e-05
          %v2263 = vrsqrt.pop %v2261
          %v2264 = vrsqrt.pop %v2262
          %v2265 = vmul.f32 %v2233, %v2263
          %v2266 = vmul.f32 %v2234, %v2263
          %v2267 = vmul.f32 %v2235, %v2263
          %v2268 = vmul.f32 %v2236, %v2263
          %v2269 = vmul.f32 %v2237, %v2264
          %v2270 = vmul.f32 %v2238, %v2264
          %v2271 = vmul.f32 %v2239, %v2264
          %v2272 = vmul.f32 %v2240, %v2264
          %2273 = vst [vmem:[#allocation9] sm:$0xff] %v2265
          %2274 = vst [vmem:[#allocation9 + $0x8] sm:$0xff] %v2266
          %2275 = vst [vmem:[#allocation9 + $0x10] sm:$0xff] %v2267
          %2276 = vst [vmem:[#allocation9 + $0x18] sm:$0xff] %v2268
          %2277 = vst [vmem:[#allocation9 + $0x20] sm:$0xff] %v2269
          %2278 = vst [vmem:[#allocation9 + $0x28] sm:$0xff] %v2270
          %2279 = vst [vmem:[#allocation9 + $0x30] sm:$0xff] %v2271
          %2280 = vst [vmem:[#allocation9 + $0x38] sm:$0xff] %v2272
        $region52: #{tpu_custom_call.1} parent=31 // pred_fallthru
          _
        // Predicated region
        $region53: #{tpu_custom_call.1} parent=31 // pred_check
          %p2281 = pneg %p127
        $region54: #{tpu_custom_call.1} parent=31 // pred_check_branch
          %2283 = sbr.rel (%p2281) target = $region56
        $region55: #{tpu_custom_call.1} parent=31 // pred_region
          %s2284 = smul.u32 2, %s23
          %s2286 = ssub.s32 1024, 1024
          %2287 = vsyncadd [#allocation5], %s2286
          %s2288 = smul.addr %s2284, 4
          %s2289 = smul.addr %s2288, 128
          %s2290 = scalar_lea.hbm %s3, %s2289
          %s2291 = sshll.u32 [#allocation9], 4
          %s2292 = int_to_ptr.vmem [resolvable:$true] %s2291
          %2297 = dma.vmem_to_hbm [thread:$0]  %s2292, 1024, %s2290, [#allocation5], 512, 512, 32
        $region56: #{tpu_custom_call.1} parent=31 // pred_fallthru
          _
        // Predicated region
        $region57: #{tpu_custom_call.1} parent=31 // pred_check
          %p2298 = pneg %p127
        $region58: #{tpu_custom_call.1} parent=31 // pred_check_branch
          %2300 = sbr.rel (%p2298) target = $region60
        $region59: #{tpu_custom_call.1} parent=31 // pred_region
          %2301 = dma.done [#allocation5], 1024
        $region60: #{tpu_custom_call.1} parent=31 // pred_fallthru
          _
      $region32: #{tpu_custom_call.1} parent=5 // pred_fallthru
        _
      %p2302 = scmp.le.s32.totalorder 2, %s14
      // Predicated region
      $region61: #{tpu_custom_call.1} parent=5 // pred_check
        %p2303 = pneg %p2302
      $region62: #{tpu_custom_call.1} parent=5 // pred_check_branch
        %2305 = sbr.rel (%p2303) target = $region64
      $region63: #{tpu_custom_call.1} parent=5 // pred_region
        %s2306 = ssub.s32 %s14, 2
      $region64: #{tpu_custom_call.1} parent=5 // pred_fallthru
        _
    $region6: #{tpu_custom_call.1} parent=1 // loop_footer
      %s18 = sadd.s32 1, %s14
    $region7: #{tpu_custom_call.1} parent=1 // loop_footer_branch
      %13 = sbr.rel target = $region3
    $region8: #{tpu_custom_call.1} parent=1 // loop_exit
      _
    %2307 = vsyncpa [#allocation4], 1
    %s2308 = scalar_lea.sflag [#allocation4], 1
    %2309 = vsyncpa %s2308, 1
    %2310 = vsyncpa [#allocation7], 1
    %s2311 = scalar_lea.sflag [#allocation7], 1
    %2312 = vsyncpa %s2311, 1
    %2313 = vsyncpa [#allocation5], 1
    %s2314 = scalar_lea.sflag [#allocation5], 1
    %2315 = vsyncpa %s2314, 1

</llo_original>
